<compile_context>
chip_gen: v7x
topology: tpu7x:2x2x1
jax: 0.10.0
libtpu: 0.0.40
codegen_flags: <defaults>
</compile_context>

<pallas_src>
import functools

import jax
import jax.numpy as jnp
from jax import lax
from jax.experimental import pallas as pl
from jax.experimental.pallas import tpu as pltpu


def _round_up(x, m):
    return ((x + m - 1) // m) * m


def _conv_bn_prelu_kernel(x_ref, xt_ref, w_ref, p_ref, o_ref, *,
                          tap_offsets, tile_m):
    """One (image, M-tile) grid step.

    x_ref : (Cin, tile_m)        compute dtype -- main window of flat padded pixels
    xt_ref: (Cin, tail)          compute dtype -- halo (next `tail` pixels)
    w_ref : (n_taps, Cout, Cin)  compute dtype -- per-tap weights (BN scale folded)
    p_ref : (Cout, 2)            f32           -- [:,0]=shift, [:,1]=PReLU alpha
    o_ref : (Cout, tile_m)       f32
    """
    x = jnp.concatenate([x_ref[...], xt_ref[...]], axis=1)   # (Cin, tile_m+tail)
    acc = None
    for t, off in enumerate(tap_offsets):                    # static unroll (KH*KW)
        win = x[:, off:off + tile_m]                          # (Cin, tile_m)
        part = jnp.dot(w_ref[t], win, preferred_element_type=jnp.float32)
        acc = part if acc is None else acc + part
    shift = p_ref[:, 0:1]                                     # (Cout, 1)
    alpha = p_ref[:, 1:2]                                     # (Cout, 1)
    y = acc + shift
    y = jnp.where(y >= 0, y, alpha * y)                       # PReLU
    o_ref[...] = y.astype(o_ref.dtype)


def conv_forward(x_nchw, weight_oihw, *, stride, padding, dilation=(1, 1),
                 groups=1, bias=None, bn_acti=False, bn_params=None,
                 tile_m=1024, compute_dtype=jnp.bfloat16):
    """Forward of the PyTorch `Conv` module (groups=1).

    x_nchw:      (N, Cin, H, W) float32
    weight_oihw: (Cout, Cin, KH, KW) float32
    bn_params:   dict(gamma, beta, mean, var, alpha), each (Cout,) -- inference
                 BatchNorm statistics + PReLU weight; required iff bn_acti.
    Returns (N, Cout, Ho, Wo) float32.
    """
    assert groups == 1, "TODO(synk): grouped conv not implemented"
    sh, sw = (stride, stride) if isinstance(stride, int) else stride
    ph, pw = (padding, padding) if isinstance(padding, int) else padding
    dh, dw = (dilation, dilation) if isinstance(dilation, int) else dilation

    N, Cin, H, W = x_nchw.shape
    Cout, Cin_w, KH, KW = weight_oihw.shape
    assert Cin == Cin_w, "groups=1 only"

    Hb, Wb = H + 2 * ph, W + 2 * pw
    Ho = (H + 2 * ph - dh * (KH - 1) - 1) // sh + 1
    Wo = (W + 2 * pw - dw * (KW - 1) - 1) // sw + 1

    f32 = jnp.float32
    w = weight_oihw.astype(f32)

    # ---- fold conv bias / BN / PReLU into per-channel scale, shift, alpha ----
    if bn_acti:
        eps = 1e-3
        gamma = bn_params["gamma"].astype(f32)
        beta = bn_params["beta"].astype(f32)
        mean = bn_params["mean"].astype(f32)
        var = bn_params["var"].astype(f32)
        alpha = bn_params["alpha"].astype(f32)
        scale = gamma / jnp.sqrt(var + eps)
        b0 = bias.astype(f32) if bias is not None else 0.0
        shift = beta + scale * (b0 - mean)
    else:
        scale = jnp.ones((Cout,), f32)
        shift = bias.astype(f32) if bias is not None else jnp.zeros((Cout,), f32)
        alpha = jnp.ones((Cout,), f32)          # PReLU with alpha=1 == identity

    # Scale folded into the weights; kernel epilogue is just +shift and PReLU.
    w_scaled = w * scale[:, None, None, None]
    # (Cout, Cin, KH, KW) -> (KH*KW, Cout, Cin), tap-major (kh outer, kw inner).
    w_taps = jnp.transpose(w_scaled, (2, 3, 0, 1)).reshape(KH * KW, Cout, Cin)
    w_taps = w_taps.astype(compute_dtype)
    params = jnp.stack([shift, alpha], axis=1).astype(f32)     # (Cout, 2)

    # ---- flat-pixel tap offsets (per image, row-major over padded H x W) ----
    tap_offsets = tuple(kh * dh * Wb + kw * dw
                        for kh in range(KH) for kw in range(KW))
    max_off = tap_offsets[-1]
    tail = max(128, _round_up(max_off, 128))
    Mimg = Hb * Wb
    tm = _round_up(min(tile_m, Mimg), tail)      # tile_m multiple of tail (>=128)
    ntiles = (Mimg + tm - 1) // tm
    Lp = ntiles * tm + tail                       # padded flat length per image

    # Channel-major, spatially padded, flattened pixels: (N, Cin, Lp).
    x_flat = x_nchw.astype(compute_dtype)
    x_flat = jnp.pad(x_flat, ((0, 0), (0, 0), (ph, ph), (pw, pw)))
    x_flat = x_flat.reshape(N, Cin, Mimg)
    x_flat = jnp.pad(x_flat, ((0, 0), (0, 0), (0, Lp - Mimg)))

    kernel = functools.partial(_conv_bn_prelu_kernel,
                               tap_offsets=tap_offsets, tile_m=tm)

    out = pl.pallas_call(
        kernel,
        out_shape=jax.ShapeDtypeStruct((N, Cout, ntiles * tm), f32),
        grid=(N, ntiles),
        in_specs=[
            # main pixel window of this tile
            pl.BlockSpec((None, Cin, tm), lambda n, i: (n, 0, i)),
            # halo: the next `tail` pixels (same array, tail-sized blocks)
            pl.BlockSpec((None, Cin, tail),
                         lambda n, i: (n, 0, (i + 1) * (tm // tail))),
            # per-tap weights (constant block -> fetched once)
            pl.BlockSpec((KH * KW, Cout, Cin), lambda n, i: (0, 0, 0)),
            # packed shift / alpha
            pl.BlockSpec((Cout, 2), lambda n, i: (0, 0)),
        ],
        out_specs=pl.BlockSpec((None, Cout, tm), lambda n, i: (n, 0, i)),
        compiler_params=pltpu.CompilerParams(
            dimension_semantics=("parallel", "parallel"),
            vmem_limit_bytes=64 * 1024 * 1024),
    )(x_flat, x_flat, w_taps, params)

    # Dense (stride-1) result over the padded grid -> crop / subsample.
    out = out[:, :, :Mimg].reshape(N, Cout, Hb, Wb)
    out = out[:, :, :(Ho - 1) * sh + 1:sh, :(Wo - 1) * sw + 1:sw]
    return out


if __name__ == "__main__":
    key = jax.random.PRNGKey(0)
    k_x, k_w, k_g, k_b, k_m, k_v = jax.random.split(key, 6)

    # Module config: Conv(nIn=4, nOut=8, kSize=3, stride=1, padding=1, bn_acti=True)
    N, Cin, H, W = 2, 4, 16, 16
    Cout, KH, KW = 8, 3, 3
    stride, padding, dilation = (1, 1), (1, 1), (1, 1)

    x = jax.random.normal(k_x, (N, Cin, H, W), jnp.float32)
    weight = jax.random.normal(k_w, (Cout, Cin, KH, KW), jnp.float32) * 0.1

    # Deterministic synthetic BatchNorm (inference stats) + PReLU params.
    bn_params = dict(
        gamma=1.0 + 0.1 * jax.random.normal(k_g, (Cout,), jnp.float32),
        beta=0.1 * jax.random.normal(k_b, (Cout,), jnp.float32),
        mean=0.05 * jax.random.normal(k_m, (Cout,), jnp.float32),
        var=jnp.abs(1.0 + 0.1 * jax.random.normal(k_v, (Cout,), jnp.float32)),
        alpha=0.25 * jnp.ones((Cout,), jnp.float32),   # nn.PReLU default init
    )

    out = conv_forward(x, weight, stride=stride, padding=padding,
                       dilation=dilation, bn_acti=True, bn_params=bn_params)
    out = jax.block_until_ready(out)

    # Pure-JAX reference with the same bf16 operand rounding as the kernel
    # (f32 accumulation), so only accumulation-order differences remain.
    eps = 1e-3
    scale = bn_params["gamma"] / jnp.sqrt(bn_params["var"] + eps)
    shift = bn_params["beta"] - bn_params["mean"] * scale
    alpha = bn_params["alpha"]
    w_scaled = (weight * scale[:, None, None, None]).astype(jnp.bfloat16)
    y = lax.conv_general_dilated(
        x.astype(jnp.bfloat16), w_scaled, window_strides=stride,
        padding=[(padding[0], padding[0]), (padding[1], padding[1])],
        rhs_dilation=dilation,
        dimension_numbers=("NCHW", "OIHW", "NCHW"),
        preferred_element_type=jnp.float32)
    y = y + shift[None, :, None, None]
    ref = jnp.where(y >= 0, y, alpha[None, :, None, None] * y)

    assert out.shape == (N, Cout, H, W)
    err = jnp.max(jnp.abs(out - ref))
    assert jnp.allclose(out, ref, rtol=5e-3, atol=5e-3), f"max abs err {err}"

    print("KERNEL_OK")
</pallas_src>

<mosaic_0001>
module attributes {stable_mosaic.version = 11 : i64} {
  func.func @_conv_bn_prelu_kernel(%arg0: i32, %arg1: i32, %arg2: memref<1x4x384xbf16, #tpu.memory_space<vmem>>, %arg3: memref<1x4x128xbf16, #tpu.memory_space<vmem>>, %arg4: memref<9x8x4xbf16, #tpu.memory_space<vmem>>, %arg5: memref<8x2xf32, #tpu.memory_space<vmem>>, %arg6: memref<1x8x384xf32, #tpu.memory_space<vmem>>) attributes {dimension_semantics = [#tpu.dimension_semantics<parallel>, #tpu.dimension_semantics<parallel>], iteration_bounds = array<i64: 2, 1>, scalar_prefetch = 0 : i64, scratch_operands = 0 : i64, tpu.core_type = #tpu.core_type<tc>, window_params = [{transform_indices = @transform_0, window_bounds = array<i64: 1, 4, 384>}, {transform_indices = @transform_1, window_bounds = array<i64: 1, 4, 128>}, {pipeline_mode = #tpu.pipeline_mode<synchronous>, transform_indices = @transform_2, window_bounds = array<i64: 9, 8, 4>}, {pipeline_mode = #tpu.pipeline_mode<synchronous>, transform_indices = @transform_3, window_bounds = array<i64: 8, 2>}, {transform_indices = @transform_4, window_bounds = array<i64: 1, 8, 384>}]} {
    %c0 = arith.constant 0 : index
    %c0_0 = arith.constant 0 : index
    %c0_1 = arith.constant 0 : index
    %0 = vector.load %arg2[%c0, %c0_0, %c0_1] : memref<1x4x384xbf16, #tpu.memory_space<vmem>>, vector<1x4x384xbf16>
    %1 = vector.shape_cast %0 : vector<1x4x384xbf16> to vector<4x384xbf16>
    %c0_2 = arith.constant 0 : index
    %c0_3 = arith.constant 0 : index
    %c0_4 = arith.constant 0 : index
    %2 = vector.load %arg3[%c0_2, %c0_3, %c0_4] : memref<1x4x128xbf16, #tpu.memory_space<vmem>>, vector<1x4x128xbf16>
    %3 = vector.shape_cast %2 : vector<1x4x128xbf16> to vector<4x128xbf16>
    %4 = tpu.concatenate %1, %3 in 1 : vector<4x384xbf16>, vector<4x128xbf16> -> vector<4x512xbf16>
    %5 = vector.extract_strided_slice %4 {offsets = [0, 0], sizes = [4, 384], strides = [1, 1]} : vector<4x512xbf16> to vector<4x384xbf16>
    %c0_5 = arith.constant 0 : index
    %c0_6 = arith.constant 0 : index
    %c0_7 = arith.constant 0 : index
    %6 = vector.load %arg4[%c0_5, %c0_6, %c0_7] : memref<9x8x4xbf16, #tpu.memory_space<vmem>>, vector<1x8x4xbf16>
    %7 = vector.shape_cast %6 : vector<1x8x4xbf16> to vector<8x4xbf16>
    %cst = arith.constant dense<0.000000e+00> : vector<8x384xf32>
    %8 = tpu.matmul %7, %5, %cst {dimension_numbers = #tpu.dot_dimension_numbers<[1], [0], [0], [1], [0, 0, 1, 1], [], []>} : vector<8x4xbf16>, vector<4x384xbf16>, vector<8x384xf32> -> vector<8x384xf32>
    %9 = vector.extract_strided_slice %4 {offsets = [0, 1], sizes = [4, 384], strides = [1, 1]} : vector<4x512xbf16> to vector<4x384xbf16>
    %c1 = arith.constant 1 : index
    %c0_8 = arith.constant 0 : index
    %c0_9 = arith.constant 0 : index
    %10 = vector.load %arg4[%c1, %c0_8, %c0_9] : memref<9x8x4xbf16, #tpu.memory_space<vmem>>, vector<1x8x4xbf16>
    %11 = vector.shape_cast %10 : vector<1x8x4xbf16> to vector<8x4xbf16>
    %cst_10 = arith.constant dense<0.000000e+00> : vector<8x384xf32>
    %12 = tpu.matmul %11, %9, %cst_10 {dimension_numbers = #tpu.dot_dimension_numbers<[1], [0], [0], [1], [0, 0, 1, 1], [], []>} : vector<8x4xbf16>, vector<4x384xbf16>, vector<8x384xf32> -> vector<8x384xf32>
    %13 = arith.addf %8, %12 : vector<8x384xf32>
    %14 = vector.extract_strided_slice %4 {offsets = [0, 2], sizes = [4, 384], strides = [1, 1]} : vector<4x512xbf16> to vector<4x384xbf16>
    %c2 = arith.constant 2 : index
    %c0_11 = arith.constant 0 : index
    %c0_12 = arith.constant 0 : index
    %15 = vector.load %arg4[%c2, %c0_11, %c0_12] : memref<9x8x4xbf16, #tpu.memory_space<vmem>>, vector<1x8x4xbf16>
    %16 = vector.shape_cast %15 : vector<1x8x4xbf16> to vector<8x4xbf16>
    %cst_13 = arith.constant dense<0.000000e+00> : vector<8x384xf32>
    %17 = tpu.matmul %16, %14, %cst_13 {dimension_numbers = #tpu.dot_dimension_numbers<[1], [0], [0], [1], [0, 0, 1, 1], [], []>} : vector<8x4xbf16>, vector<4x384xbf16>, vector<8x384xf32> -> vector<8x384xf32>
    %18 = arith.addf %13, %17 : vector<8x384xf32>
    %19 = vector.extract_strided_slice %4 {offsets = [0, 18], sizes = [4, 384], strides = [1, 1]} : vector<4x512xbf16> to vector<4x384xbf16>
    %c3 = arith.constant 3 : index
    %c0_14 = arith.constant 0 : index
    %c0_15 = arith.constant 0 : index
    %20 = vector.load %arg4[%c3, %c0_14, %c0_15] : memref<9x8x4xbf16, #tpu.memory_space<vmem>>, vector<1x8x4xbf16>
    %21 = vector.shape_cast %20 : vector<1x8x4xbf16> to vector<8x4xbf16>
    %cst_16 = arith.constant dense<0.000000e+00> : vector<8x384xf32>
    %22 = tpu.matmul %21, %19, %cst_16 {dimension_numbers = #tpu.dot_dimension_numbers<[1], [0], [0], [1], [0, 0, 1, 1], [], []>} : vector<8x4xbf16>, vector<4x384xbf16>, vector<8x384xf32> -> vector<8x384xf32>
    %23 = arith.addf %18, %22 : vector<8x384xf32>
    %24 = vector.extract_strided_slice %4 {offsets = [0, 19], sizes = [4, 384], strides = [1, 1]} : vector<4x512xbf16> to vector<4x384xbf16>
    %c4 = arith.constant 4 : index
    %c0_17 = arith.constant 0 : index
    %c0_18 = arith.constant 0 : index
    %25 = vector.load %arg4[%c4, %c0_17, %c0_18] : memref<9x8x4xbf16, #tpu.memory_space<vmem>>, vector<1x8x4xbf16>
    %26 = vector.shape_cast %25 : vector<1x8x4xbf16> to vector<8x4xbf16>
    %cst_19 = arith.constant dense<0.000000e+00> : vector<8x384xf32>
    %27 = tpu.matmul %26, %24, %cst_19 {dimension_numbers = #tpu.dot_dimension_numbers<[1], [0], [0], [1], [0, 0, 1, 1], [], []>} : vector<8x4xbf16>, vector<4x384xbf16>, vector<8x384xf32> -> vector<8x384xf32>
    %28 = arith.addf %23, %27 : vector<8x384xf32>
    %29 = vector.extract_strided_slice %4 {offsets = [0, 20], sizes = [4, 384], strides = [1, 1]} : vector<4x512xbf16> to vector<4x384xbf16>
    %c5 = arith.constant 5 : index
    %c0_20 = arith.constant 0 : index
    %c0_21 = arith.constant 0 : index
    %30 = vector.load %arg4[%c5, %c0_20, %c0_21] : memref<9x8x4xbf16, #tpu.memory_space<vmem>>, vector<1x8x4xbf16>
    %31 = vector.shape_cast %30 : vector<1x8x4xbf16> to vector<8x4xbf16>
    %cst_22 = arith.constant dense<0.000000e+00> : vector<8x384xf32>
    %32 = tpu.matmul %31, %29, %cst_22 {dimension_numbers = #tpu.dot_dimension_numbers<[1], [0], [0], [1], [0, 0, 1, 1], [], []>} : vector<8x4xbf16>, vector<4x384xbf16>, vector<8x384xf32> -> vector<8x384xf32>
    %33 = arith.addf %28, %32 : vector<8x384xf32>
    %34 = vector.extract_strided_slice %4 {offsets = [0, 36], sizes = [4, 384], strides = [1, 1]} : vector<4x512xbf16> to vector<4x384xbf16>
    %c6 = arith.constant 6 : index
    %c0_23 = arith.constant 0 : index
    %c0_24 = arith.constant 0 : index
    %35 = vector.load %arg4[%c6, %c0_23, %c0_24] : memref<9x8x4xbf16, #tpu.memory_space<vmem>>, vector<1x8x4xbf16>
    %36 = vector.shape_cast %35 : vector<1x8x4xbf16> to vector<8x4xbf16>
    %cst_25 = arith.constant dense<0.000000e+00> : vector<8x384xf32>
    %37 = tpu.matmul %36, %34, %cst_25 {dimension_numbers = #tpu.dot_dimension_numbers<[1], [0], [0], [1], [0, 0, 1, 1], [], []>} : vector<8x4xbf16>, vector<4x384xbf16>, vector<8x384xf32> -> vector<8x384xf32>
    %38 = arith.addf %33, %37 : vector<8x384xf32>
    %39 = vector.extract_strided_slice %4 {offsets = [0, 37], sizes = [4, 384], strides = [1, 1]} : vector<4x512xbf16> to vector<4x384xbf16>
    %c7 = arith.constant 7 : index
    %c0_26 = arith.constant 0 : index
    %c0_27 = arith.constant 0 : index
    %40 = vector.load %arg4[%c7, %c0_26, %c0_27] : memref<9x8x4xbf16, #tpu.memory_space<vmem>>, vector<1x8x4xbf16>
    %41 = vector.shape_cast %40 : vector<1x8x4xbf16> to vector<8x4xbf16>
    %cst_28 = arith.constant dense<0.000000e+00> : vector<8x384xf32>
    %42 = tpu.matmul %41, %39, %cst_28 {dimension_numbers = #tpu.dot_dimension_numbers<[1], [0], [0], [1], [0, 0, 1, 1], [], []>} : vector<8x4xbf16>, vector<4x384xbf16>, vector<8x384xf32> -> vector<8x384xf32>
    %43 = arith.addf %38, %42 : vector<8x384xf32>
    %44 = vector.extract_strided_slice %4 {offsets = [0, 38], sizes = [4, 384], strides = [1, 1]} : vector<4x512xbf16> to vector<4x384xbf16>
    %c8 = arith.constant 8 : index
    %c0_29 = arith.constant 0 : index
    %c0_30 = arith.constant 0 : index
    %45 = vector.load %arg4[%c8, %c0_29, %c0_30] : memref<9x8x4xbf16, #tpu.memory_space<vmem>>, vector<1x8x4xbf16>
    %46 = vector.shape_cast %45 : vector<1x8x4xbf16> to vector<8x4xbf16>
    %cst_31 = arith.constant dense<0.000000e+00> : vector<8x384xf32>
    %47 = tpu.matmul %46, %44, %cst_31 {dimension_numbers = #tpu.dot_dimension_numbers<[1], [0], [0], [1], [0, 0, 1, 1], [], []>} : vector<8x4xbf16>, vector<4x384xbf16>, vector<8x384xf32> -> vector<8x384xf32>
    %48 = arith.addf %43, %47 : vector<8x384xf32>
    %c0_32 = arith.constant 0 : index
    %c0_33 = arith.constant 0 : index
    %49 = vector.load %arg5[%c0_32, %c0_33] : memref<8x2xf32, #tpu.memory_space<vmem>>, vector<8x1xf32>
    %c0_34 = arith.constant 0 : index
    %c1_35 = arith.constant 1 : index
    %50 = vector.load %arg5[%c0_34, %c1_35] : memref<8x2xf32, #tpu.memory_space<vmem>>, vector<8x1xf32>
    %51 = vector.broadcast %49 : vector<8x1xf32> to vector<8x384xf32>
    %52 = arith.addf %48, %51 : vector<8x384xf32>
    %cst_36 = arith.constant 0.000000e+00 : f32
    %53 = vector.broadcast %cst_36 : f32 to vector<8x384xf32>
    %54 = arith.cmpf oge, %52, %53 : vector<8x384xf32>
    %55 = vector.broadcast %50 : vector<8x1xf32> to vector<8x384xf32>
    %56 = arith.mulf %55, %52 : vector<8x384xf32>
    %57 = arith.select %54, %52, %56 : vector<8x384xi1>, vector<8x384xf32>
    %c0_37 = arith.constant 0 : index
    %c0_38 = arith.constant 0 : index
    %c0_39 = arith.constant 0 : index
    %58 = vector.load %arg6[%c0_37, %c0_38, %c0_39] : memref<1x8x384xf32, #tpu.memory_space<vmem>>, vector<1x8x384xf32>
    %59 = vector.shape_cast %58 : vector<1x8x384xf32> to vector<8x384xf32>
    %60 = vector.shape_cast %57 : vector<8x384xf32> to vector<1x8x384xf32>
    tpu.vector_store %arg6[%c0_37, %c0_38, %c0_39], %60 {strides = array<i32>} : memref<1x8x384xf32, #tpu.memory_space<vmem>>, vector<1x8x384xf32>,
    return
  }
  func.func @transform_0(%arg0: i32, %arg1: i32) -> (i32, i32, i32) {
    %c0_i32 = arith.constant 0 : i32
    %c0_i32_0 = arith.constant 0 : i32
    return %arg0, %c0_i32, %arg1 : i32, i32, i32
  }
  func.func @transform_1(%arg0: i32, %arg1: i32) -> (i32, i32, i32) {
    %c1_i32 = arith.constant 1 : i32
    %0 = arith.addi %arg1, %c1_i32 : i32
    %c3_i32 = arith.constant 3 : i32
    %1 = arith.muli %0, %c3_i32 : i32
    %c0_i32 = arith.constant 0 : i32
    %c0_i32_0 = arith.constant 0 : i32
    return %arg0, %c0_i32, %1 : i32, i32, i32
  }
  func.func @transform_2(%arg0: i32, %arg1: i32) -> (i32, i32, i32) {
    %c0_i32 = arith.constant 0 : i32
    %c0_i32_0 = arith.constant 0 : i32
    %c0_i32_1 = arith.constant 0 : i32
    %c0_i32_2 = arith.constant 0 : i32
    return %c0_i32, %c0_i32_0, %c0_i32_1 : i32, i32, i32
  }
  func.func @transform_3(%arg0: i32, %arg1: i32) -> (i32, i32) {
    %c0_i32 = arith.constant 0 : i32
    %c0_i32_0 = arith.constant 0 : i32
    %c0_i32_1 = arith.constant 0 : i32
    return %c0_i32, %c0_i32_0 : i32, i32
  }
  func.func @transform_4(%arg0: i32, %arg1: i32) -> (i32, i32, i32) {
    %c0_i32 = arith.constant 0 : i32
    %c0_i32_0 = arith.constant 0 : i32
    return %arg0, %c0_i32, %arg1 : i32, i32, i32
  }
}

</mosaic_0001>

<llo_original>
// kernel: tpu_custom_call.1
$region0: #{tpu_custom_call.1}
  #allocation0 [shape = 'u32[]', space=smem, size = 0x4, offset = 0x4, fixed_abs, tag = 'smem constant byte address 0x4 - core index']
  #allocation1 [shape = 'u32[144,128]{1,0:T(1,128)}', space=vmem, size = 0x12000, scoped, tag = 'internal scratch']
  %s0 = inlined_call_operand.hbm [shape: bf16[2,4,512], index: 0, kind: input, shape index: {}]
  %s1 = inlined_call_operand.hbm [shape: bf16[2,4,512], index: 1, kind: input, shape index: {}]
  %s2 = inlined_call_operand.hbm [shape: bf16[9,8,4], index: 2, kind: input, shape index: {}]
  %s3 = inlined_call_operand.hbm [shape: f32[8,2], index: 3, kind: input, shape index: {}]
  %s4 = inlined_call_operand.hbm [shape: f32[2,8,384], index: 4, kind: output, shape index: {}]
  %s5 = sld [smem:[#allocation0]]
  $region65: #{tpu_custom_call.1} parent=0
    _
  %s7 = ssub.s32 1, %s5
  %s8 = scalar_select 0, %s7, %s5
  $region1: #{tpu_custom_call.1} parent=0
    #allocation2 [shape = 'u8[6144]{0}', space=vmem, size = 0x1800, scoped, tag = 'input window, operand 0']
    #allocation3 [shape = 's32[2]{0}', space=sflag, size = 0x8, scoped, tag = 'scoped memory for tpu_custom_call.1']
    #allocation4 [shape = 's32[2]{0}', space=sflag, size = 0x8, scoped, tag = 'scoped memory for tpu_custom_call.1']
    #allocation5 [shape = 'u8[2048]{0}', space=vmem, size = 0x800, scoped, tag = 'input window, operand 1']
    #allocation6 [shape = 's32[2]{0}', space=sflag, size = 0x8, scoped, tag = 'scoped memory for tpu_custom_call.1']
    #allocation7 [shape = 'u8[18432]{0}', space=vmem, size = 0x4800, scoped, tag = 'input window, operand 2, single buffered']
    #allocation8 [shape = 'u8[4096]{0}', space=vmem, size = 0x1000, scoped, tag = 'input window, operand 3, single buffered']
    #allocation9 [shape = 's32[1]{0}', space=sflag, size = 0x4, scoped, tag = 'scoped memory for tpu_custom_call.1']
    #allocation10 [shape = 'u8[24576]{0}', space=vmem, size = 0x6000, scoped, tag = 'output window, operand 0']
    %9 = vsyncpa [#allocation3], 0
    %s10 = scalar_lea.sflag [#allocation3], 1
    %11 = vsyncpa %s10, 0
    %12 = vsyncpa [#allocation6], 0
    %s13 = scalar_lea.sflag [#allocation6], 1
    %14 = vsyncpa %s13, 0
    %15 = vsyncpa [#allocation9], 0
    %16 = vsyncpa [#allocation4], 0
    %s17 = scalar_lea.sflag [#allocation4], 1
    %18 = vsyncpa %s17, 0
    loop: start=0, step=1, limit=4
    $region2: #{tpu_custom_call.1} parent=1 // loop_pre_header
      _
    $region3: #{tpu_custom_call.1} parent=1 // loop_header
      %s20 = sphi 0, %s24
      %p21 = scmp.ge.s32.totalorder %s20, 4
      %s27 = sphi 0, %s39
      %s28 = sphi 0, %s35
      %s29 = sphi 0, %s27
      %s30 = sphi 0, %s28
      %s31 = sphi 0, %s29
      %s32 = sphi 0, %s30
      %s44 = sphi 0, %s46
      %s47 = sphi 0, %s44
      %s48 = sphi 0, %s47
      %s64 = sphi 0, %s48
      %s76 = sphi 0, %s78
      %s79 = sphi 0, %s76
      %s80 = sphi 0, %s79
      %s96 = sphi 0, %s80
      %s100 = sphi 0, %s100
      %s102 = sphi 0, %s100
      %s103 = sphi 0, %s102
      %s117 = sphi 0, %s103
      %s121 = sphi 0, %s121
      %s123 = sphi 0, %s121
      %s124 = sphi 0, %s123
      %s138 = sphi 0, %s124
      %s146 = sphi 0, %s148
      %s149 = sphi 0, %s146
      %s150 = sphi 0, %s149
      %s166 = sphi 0, %s150
    $region4: #{tpu_custom_call.1} parent=1 // loop_header_branch
      %23 = sbr.rel (%p21) target = $region8
    $region5: #{tpu_custom_call.1} parent=1 // loop_body
      %s25 = ssub.s32 %s20, 1
      %s26 = ssub.s32 %s20, 2
      %s33 = sadd.s32 1, %s28
      %p34 = scmp.ge.s32.totalorder %s33, 1
      %s35 = scalar_select %p34, 0, %s33
      %s36 = sadd.s32 1, %s27
      %s37 = scalar_select %p34, %s36, %s27
      %p38 = scmp.ge.s32.totalorder %s37, 2
      %s39 = scalar_select %p38, 0, %s37
      %s40 = ssub.s32 %s27, %s39
      %s41 = ssub.s32 %s28, %s35
      %s42 = sor.u32 %s40, %s41
      %p43 = scmp.eq.s32.totalorder %s42, 0
      %s45 = sadd.s32 %s44, 1
      %s46 = scalar_select %p43, %s44, %s45
      %p49 = pneg %p43
      %p50 = scmp.eq.s32.totalorder %s20, 1
      %p51 = por %p49, %p50
      %p52 = scmp.ne.s32.totalorder %s44, %s47
      %p53 = scmp.eq.s32.totalorder %s20, 0
      %p54 = por %p52, %p53
      %p55 = scmp.ne.s32.totalorder %s44, %s47
      %p56 = scmp.eq.s32.totalorder %s25, 1
      %p57 = por %p55, %p56
      %p58 = scmp.ne.s32.totalorder %s47, %s48
      %p59 = scmp.eq.s32.totalorder %s25, 0
      %p60 = por %p58, %p59
      %p61 = scmp.ne.s32.totalorder %s47, %s48
      %p62 = scmp.eq.s32.totalorder %s26, 1
      %p63 = por %p61, %p62
      %p65 = scmp.ne.s32.totalorder %s48, %s64
      %p66 = scmp.eq.s32.totalorder %s26, 0
      %p67 = por %p65, %p66
      %s68 = sadd.s32 %s28, 1
      %s69 = smul.u32 %s68, 3
      %s70 = sadd.s32 %s35, 1
      %s71 = smul.u32 %s70, 3
      %s72 = ssub.s32 %s27, %s39
      %s73 = ssub.s32 %s69, %s71
      %s74 = sor.u32 %s72, %s73
      %p75 = scmp.eq.s32.totalorder %s74, 0
      %s77 = sadd.s32 %s76, 1
      %s78 = scalar_select %p75, %s76, %s77
      %p81 = pneg %p75
      %p82 = scmp.eq.s32.totalorder %s20, 1
      %p83 = por %p81, %p82
      %p84 = scmp.ne.s32.totalorder %s76, %s79
      %p85 = scmp.eq.s32.totalorder %s20, 0
      %p86 = por %p84, %p85
      %p87 = scmp.ne.s32.totalorder %s76, %s79
      %p88 = scmp.eq.s32.totalorder %s25, 1
      %p89 = por %p87, %p88
      %p90 = scmp.ne.s32.totalorder %s79, %s80
      %p91 = scmp.eq.s32.totalorder %s25, 0
      %p92 = por %p90, %p91
      %p93 = scmp.ne.s32.totalorder %s79, %s80
      %p94 = scmp.eq.s32.totalorder %s26, 1
      %p95 = por %p93, %p94
      %p97 = scmp.ne.s32.totalorder %s80, %s96
      %p98 = scmp.eq.s32.totalorder %s26, 0
      %p99 = por %p97, %p98
      %s101 = sadd.s32 %s100, 1
      %p104 = scmp.eq.s32.totalorder %s20, 1
      %p105 = scmp.ne.s32.totalorder %s100, %s102
      %p106 = scmp.eq.s32.totalorder %s20, 0
      %p107 = por %p105, %p106
      %p108 = scmp.ne.s32.totalorder %s100, %s102
      %p109 = scmp.eq.s32.totalorder %s25, 1
      %p110 = por %p108, %p109
      %p111 = scmp.ne.s32.totalorder %s102, %s103
      %p112 = scmp.eq.s32.totalorder %s25, 0
      %p113 = por %p111, %p112
      %p114 = scmp.ne.s32.totalorder %s102, %s103
      %p115 = scmp.eq.s32.totalorder %s26, 1
      %p116 = por %p114, %p115
      %p118 = scmp.ne.s32.totalorder %s103, %s117
      %p119 = scmp.eq.s32.totalorder %s26, 0
      %p120 = por %p118, %p119
      %s122 = sadd.s32 %s121, 1
      %p125 = scmp.eq.s32.totalorder %s20, 1
      %p126 = scmp.ne.s32.totalorder %s121, %s123
      %p127 = scmp.eq.s32.totalorder %s20, 0
      %p128 = por %p126, %p127
      %p129 = scmp.ne.s32.totalorder %s121, %s123
      %p130 = scmp.eq.s32.totalorder %s25, 1
      %p131 = por %p129, %p130
      %p132 = scmp.ne.s32.totalorder %s123, %s124
      %p133 = scmp.eq.s32.totalorder %s25, 0
      %p134 = por %p132, %p133
      %p135 = scmp.ne.s32.totalorder %s123, %s124
      %p136 = scmp.eq.s32.totalorder %s26, 1
      %p137 = por %p135, %p136
      %p139 = scmp.ne.s32.totalorder %s124, %s138
      %p140 = scmp.eq.s32.totalorder %s26, 0
      %p141 = por %p139, %p140
      %s142 = ssub.s32 %s27, %s39
      %s143 = ssub.s32 %s28, %s35
      %s144 = sor.u32 %s142, %s143
      %p145 = scmp.eq.s32.totalorder %s144, 0
      %s147 = sadd.s32 %s146, 1
      %s148 = scalar_select %p145, %s146, %s147
      %p151 = pneg %p145
      %p152 = scmp.eq.s32.totalorder %s20, 1
      %p153 = por %p151, %p152
      %p154 = scmp.ne.s32.totalorder %s146, %s149
      %p155 = scmp.eq.s32.totalorder %s20, 0
      %p156 = por %p154, %p155
      %p157 = scmp.ne.s32.totalorder %s146, %s149
      %p158 = scmp.eq.s32.totalorder %s25, 1
      %p159 = por %p157, %p158
      %p160 = scmp.ne.s32.totalorder %s149, %s150
      %p161 = scmp.eq.s32.totalorder %s25, 0
      %p162 = por %p160, %p161
      %p163 = scmp.ne.s32.totalorder %s149, %s150
      %p164 = scmp.eq.s32.totalorder %s26, 1
      %p165 = por %p163, %p164
      %p167 = scmp.ne.s32.totalorder %s150, %s166
      %p168 = scmp.eq.s32.totalorder %s26, 0
      %p169 = por %p167, %p168
      %p170 = scmp.le.s32.totalorder 1, %s20
      %p171 = scmp.lt.s32.totalorder %s20, 3
      %p172 = pnand %p170, %p171
      %p173 = pneg %p172
      // Predicated region
      $region9: #{tpu_custom_call.1} parent=5 // pred_check
        _
      $region10: #{tpu_custom_call.1} parent=5 // pred_check_branch
        %175 = sbr.rel (%p172) target = $region12
      $region11: #{tpu_custom_call.1} parent=5 // pred_region
        %s176 = ssub.s32 %s20, 1
        // Predicated region
        $region13: #{tpu_custom_call.1} parent=11 // pred_check
          %p177 = pneg %p113
        $region14: #{tpu_custom_call.1} parent=11 // pred_check_branch
          %179 = sbr.rel (%p177) target = $region16
        $region15: #{tpu_custom_call.1} parent=11 // pred_region
          %s181 = ssub.s32 576, 576
          %182 = vsyncadd [#allocation6], %s181
          %s183 = sshll.u32 [#allocation7], 4
          %s184 = int_to_ptr.vmem [resolvable:$true] %s183
          %189 = dma.hbm_to_vmem [thread:$0]  %s2, 576, %s184, [#allocation6], 64, 64, 4
        $region16: #{tpu_custom_call.1} parent=11 // pred_fallthru
          _
        // Predicated region
        $region17: #{tpu_custom_call.1} parent=11 // pred_check
          %p190 = pneg %p134
        $region18: #{tpu_custom_call.1} parent=11 // pred_check_branch
          %192 = sbr.rel (%p190) target = $region20
        $region19: #{tpu_custom_call.1} parent=11 // pred_region
          %s194 = ssub.s32 128, 128
          %195 = vsyncadd [#allocation9], %s194
          %s197 = sshll.u32 [#allocation8], 4
          %s198 = int_to_ptr.vmem [resolvable:$true] %s197
          %200 = dma.hbm_to_vmem [thread:$0]  %s3, 128, %s198, [#allocation9]
        $region20: #{tpu_custom_call.1} parent=11 // pred_fallthru
          _
      $region12: #{tpu_custom_call.1} parent=5 // pred_fallthru
        _
      %p201 = scmp.lt.s32.totalorder %s20, 2
      // Predicated region
      $region21: #{tpu_custom_call.1} parent=5 // pred_check
        %p202 = pneg %p201
      $region22: #{tpu_custom_call.1} parent=5 // pred_check_branch
        %204 = sbr.rel (%p202) target = $region24
      $region23: #{tpu_custom_call.1} parent=5 // pred_region
        // Predicated region
        $region25: #{tpu_custom_call.1} parent=23 // pred_check
          %p205 = pneg %p54
        $region26: #{tpu_custom_call.1} parent=23 // pred_check_branch
          %207 = sbr.rel (%p205) target = $region28
        $region27: #{tpu_custom_call.1} parent=23 // pred_region
          %s208 = sand.u32 %s44, 1
          %s209 = scalar_lea.sflag [#allocation3], %s208
          %s210 = sand.u32 %s44, 1
          %s211 = smul.addr %s210, 6
          %s212 = scalar_lea.vmem [#allocation2], %s211
          %s213 = smul.u32 3, %s28
          %s214 = ssub.s32 4, %s213
          %p215 = scmp.lt.s32.totalorder %s214, 3
          %s216 = scalar_select %p215, %s214, 3
          %s217 = smul.u32 32, %s216
          %s219 = ssub.s32 96, %s217
          %220 = vsyncadd %s209, %s219
          %p221 = scmp.ne.s32.totalorder 0, %s217
          %s222 = smul.addr %s27, 4
          %s223 = sadd.s32 %s213, %s222
          %s224 = smul.addr %s223, 32
          %s225 = scalar_lea.hbm %s0, %s224
          %s226 = smul.u32 %s216, 2
          %s227 = sshll.u32 %s226, 4
          %s228 = sshll.u32 %s212, 4
          %s229 = int_to_ptr.vmem [resolvable:$true] %s228
          %231 = dma.hbm_to_vmem [thread:$0]  (%p221), %s225, %s227, %s229, %s209
        $region28: #{tpu_custom_call.1} parent=23 // pred_fallthru
          _
        // Predicated region
        $region29: #{tpu_custom_call.1} parent=23 // pred_check
          %p232 = pneg %p86
        $region30: #{tpu_custom_call.1} parent=23 // pred_check_branch
          %234 = sbr.rel (%p232) target = $region32
        $region31: #{tpu_custom_call.1} parent=23 // pred_region
          %s235 = sand.u32 %s20, 1
          %s236 = scalar_lea.sflag [#allocation6], %s235
          %s237 = sand.u32 %s76, 1
          %s238 = smul.addr %s237, 2
          %s239 = scalar_lea.vmem [#allocation5], %s238
          %s240 = sadd.s32 %s28, 1
          %s241 = smul.u32 %s240, 3
          %s243 = ssub.s32 32, 32
          %244 = vsyncadd %s236, %s243
          %s245 = smul.addr %s27, 4
          %s246 = sadd.s32 %s241, %s245
          %s247 = smul.addr %s246, 32
          %s248 = scalar_lea.hbm %s1, %s247
          %s250 = sshll.u32 %s239, 4
          %s251 = int_to_ptr.vmem [resolvable:$true] %s250
          %253 = dma.hbm_to_vmem [thread:$0]  %s248, 32, %s251, %s236
        $region32: #{tpu_custom_call.1} parent=23 // pred_fallthru
          _
      $region24: #{tpu_custom_call.1} parent=5 // pred_fallthru
        _
      %p254 = scmp.le.s32.totalorder 1, %s20
      %p255 = scmp.lt.s32.totalorder %s20, 3
      %p256 = pnand %p254, %p255
      %p257 = pneg %p256
      // Predicated region
      $region33: #{tpu_custom_call.1} parent=5 // pred_check
        _
      $region34: #{tpu_custom_call.1} parent=5 // pred_check_branch
        %259 = sbr.rel (%p256) target = $region36
      $region35: #{tpu_custom_call.1} parent=5 // pred_region
        %s260 = ssub.s32 %s20, 1
        %s261 = sand.u32 %s47, 1
        %s262 = scalar_lea.sflag [#allocation3], %s261
        %s263 = sand.u32 %s47, 1
        %s264 = smul.addr %s263, 6
        %s265 = scalar_lea.vmem [#allocation2], %s264
        // Predicated region
        $region37: #{tpu_custom_call.1} parent=35 // pred_check
          %p266 = pneg %p60
        $region38: #{tpu_custom_call.1} parent=35 // pred_check_branch
          %268 = sbr.rel (%p266) target = $region40
        $region39: #{tpu_custom_call.1} parent=35 // pred_region
          %269 = dma.done %s262, 96
        $region40: #{tpu_custom_call.1} parent=35 // pred_fallthru
          _
        %s270 = sand.u32 %s25, 1
        %s271 = scalar_lea.sflag [#allocation6], %s270
        %s272 = sand.u32 %s79, 1
        %s273 = smul.addr %s272, 2
        %s274 = scalar_lea.vmem [#allocation5], %s273
        // Predicated region
        $region41: #{tpu_custom_call.1} parent=35 // pred_check
          %p275 = pneg %p92
        $region42: #{tpu_custom_call.1} parent=35 // pred_check_branch
          %277 = sbr.rel (%p275) target = $region44
        $region43: #{tpu_custom_call.1} parent=35 // pred_region
          %278 = dma.done %s271, 32
        $region44: #{tpu_custom_call.1} parent=35 // pred_fallthru
          _
        // Predicated region
        $region45: #{tpu_custom_call.1} parent=35 // pred_check
          %p279 = pneg %p113
        $region46: #{tpu_custom_call.1} parent=35 // pred_check_branch
          %281 = sbr.rel (%p279) target = $region48
        $region47: #{tpu_custom_call.1} parent=35 // pred_region
          %282 = dma.done [#allocation6], 576
        $region48: #{tpu_custom_call.1} parent=35 // pred_fallthru
          _
        // Predicated region
        $region49: #{tpu_custom_call.1} parent=35 // pred_check
          %p283 = pneg %p134
        $region50: #{tpu_custom_call.1} parent=35 // pred_check_branch
          %285 = sbr.rel (%p283) target = $region52
        $region51: #{tpu_custom_call.1} parent=35 // pred_region
          %286 = dma.done [#allocation9], 128
        $region52: #{tpu_custom_call.1} parent=35 // pred_fallthru
          _
        %s287 = sand.u32 %s47, 1
        %s288 = scalar_lea.sflag [#allocation3], %s287
        %s289 = sand.u32 %s47, 1
        %s290 = smul.addr %s289, 6
        %s291 = scalar_lea.vmem [#allocation2], %s290
        %p292 = pneg %p60
        %p293 = pneg %p57
        %s294 = sand.u32 %s25, 1
        %s295 = scalar_lea.sflag [#allocation6], %s294
        %s296 = sand.u32 %s79, 1
        %s297 = smul.addr %s296, 2
        %s298 = scalar_lea.vmem [#allocation5], %s297
        %p299 = pneg %p92
        %p300 = pneg %p89
        %p301 = pneg %p113
        %p302 = pneg %p110
        %p303 = pneg %p134
        %p304 = pneg %p131
        %p305 = pneg %p162
        %p306 = pneg %p159
        %s307 = sand.u32 %s149, 1
        %s308 = scalar_lea.sflag [#allocation4], %s307
        %s309 = sand.u32 %s149, 1
        %s310 = smul.addr %s309, 24
        %s311 = scalar_lea.vmem [#allocation10], %s310
        %s312 = smul.u32 3, %s30
        %s313 = ssub.s32 4, %s312
        %p314 = scmp.lt.s32.totalorder %s313, 3
        %s315 = scalar_select %p314, %s313, 3
        %s316 = smul.u32 32, %s315
        %s317 = sadd.s32 %s30, 1
        %s318 = smul.u32 %s317, 3
        %s319 = smul.u32 3, %s30
        %v321 = vld [vmem:[%s265] sm:$0x3f]
        %v322 = vld [vmem:[%s274] sm:$0x3]
        %v324 = vcombine.high %v321, %v321
        %v326 = vunpack.c.l.s4 1983009808
        %v327 = vunpack.c.0.s8 %v326
        %v328 = vlaneseq
        %v329 = vshrl.u32 %v328, 7
        %v330 = vsub.s32 %v327, %v329
        %v331 = vrot.slane %v321, %v330
        %v333 = vunpack.c.l.s4 1983009808
        %v334 = vunpack.c.0.s8 %v333
        %v335 = vlaneseq
        %v336 = vshrl.u32 %v335, 7
        %v337 = vsub.s32 %v334, %v336
        %v338 = vrot.slane %v324, %v337
        %v339 = vcombine.high %v331, %v331
        %v340 = vld [vmem:[#allocation7] sm:$0xf]
        %s341 = scalar_lea.vmem [#allocation7], 4
        %v342 = vld [vmem:[%s341] sm:$0xf]
        %344 = vrot.lane.b32.xlu0 %v331, 127
        %v345 = vpop.permute.xlu0 %344
        %346 = vrot.lane.b32.xlu0 %v339, 127
        %v347 = vpop.permute.xlu0 %346
        %348 = vrot.lane.b32.xlu0 %v338, 127
        %v349 = vpop.permute.xlu0 %348
        %350 = vrot.lane.b32.xlu0 %v322, 127
        %v351 = vpop.permute.xlu0 %350
        %vm352 = vcmask 1039360
        %v353 = vsel %vm352, %v345, %v347
        %v354 = vsel %vm352, %v347, %v349
        %v355 = vsel %vm352, %v349, %v351
        %vm356 = vcmask 31744
        %v358 = vsel %vm356, %v342, 0
        %vm360 = vcmask 1041408
        %v362 = vsel %vm360, %v353, 0
        %v365 = vsel %vm360, %v354, 0
        %v368 = vsel %vm360, %v355, 0
        %370 = vmatprep.subr.bf16.mxu0 %v365
        %371 = vmatpush1.bf16.msra.mxu0 %v362
        %372 = vmatprep.subr.bf16.mxu0 0
        %373 = vmatpush1.bf16.msra.mxu0 0
        %374 = vmatprep.subr.bf16.mxu0 0
        %375 = vmatpush1.bf16.msra.mxu0 0
        %376 = vmatprep.subr.bf16.mxu0 0
        %377 = vmatpush1.bf16.msra.mxu0 0
        %378 = vmatprep.subr.bf16.mxu0 0
        %379 = vmatpush1.bf16.msra.mxu0 0
        %380 = vmatprep.subr.bf16.mxu0 0
        %381 = vmatpush1.bf16.msra.mxu0 0
        %382 = vmatprep.subr.bf16.mxu0 0
        %383 = vmatpush1.bf16.msra.mxu0 0
        %384 = vmatprep.subr.bf16.mxu0 0
        %385 = vmatpush1.bf16.msra.mxu0 0
        %386 = vmatprep.subr.bf16.mxu0 0
        %387 = vmatpush1.bf16.msra.mxu0 0
        %388 = vmatprep.subr.bf16.mxu0 0
        %389 = vmatpush1.bf16.msra.mxu0 0
        %390 = vmatprep.subr.bf16.mxu0 0
        %391 = vmatpush1.bf16.msra.mxu0 0
        %392 = vmatprep.subr.bf16.mxu0 0
        %393 = vmatpush1.bf16.msra.mxu0 0
        %394 = vmatprep.subr.bf16.mxu0 0
        %395 = vmatpush1.bf16.msra.mxu0 0
        %396 = vmatprep.subr.bf16.mxu0 0
        %397 = vmatpush1.bf16.msra.mxu0 0
        %398 = vmatprep.subr.bf16.mxu0 0
        %399 = vmatpush1.bf16.msra.mxu0 0
        %400 = vmatprep.subr.bf16.mxu0 0
        %401 = vmatpush1.bf16.msra.mxu0 0
        %402 = vmatprep.mubr.bf16.mxu0 0
        %403 = vmatmul.mubr.bf16.gmra.mrb[0].mxu0 %v358
        %v404 = vpop.f32.mrb[0].mxu0
        %v405 = vadd.f32 0.0, %v404
        %v406 = vpop.f32.mrb[0].mxu0
        %v407 = vadd.f32 0.0, %v406
        %v408 = vpop.f32.mrb[0].mxu0
        %v409 = vpop.f32.mrb[0].mxu0
        %410 = vdwg.mxu0
        %411 = vmatprep.subr.bf16.mxu0 0
        %412 = vmatpush1.bf16.msra.mxu0 %v368
        %413 = vmatprep.subr.bf16.mxu0 0
        %414 = vmatpush1.bf16.msra.mxu0 0
        %415 = vmatprep.subr.bf16.mxu0 0
        %416 = vmatpush1.bf16.msra.mxu0 0
        %417 = vmatprep.subr.bf16.mxu0 0
        %418 = vmatpush1.bf16.msra.mxu0 0
        %419 = vmatprep.subr.bf16.mxu0 0
        %420 = vmatpush1.bf16.msra.mxu0 0
        %421 = vmatprep.subr.bf16.mxu0 0
        %422 = vmatpush1.bf16.msra.mxu0 0
        %423 = vmatprep.subr.bf16.mxu0 0
        %424 = vmatpush1.bf16.msra.mxu0 0
        %425 = vmatprep.subr.bf16.mxu0 0
        %426 = vmatpush1.bf16.msra.mxu0 0
        %427 = vmatprep.subr.bf16.mxu0 0
        %428 = vmatpush1.bf16.msra.mxu0 0
        %429 = vmatprep.subr.bf16.mxu0 0
        %430 = vmatpush1.bf16.msra.mxu0 0
        %431 = vmatprep.subr.bf16.mxu0 0
        %432 = vmatpush1.bf16.msra.mxu0 0
        %433 = vmatprep.subr.bf16.mxu0 0
        %434 = vmatpush1.bf16.msra.mxu0 0
        %435 = vmatprep.subr.bf16.mxu0 0
        %436 = vmatpush1.bf16.msra.mxu0 0
        %437 = vmatprep.subr.bf16.mxu0 0
        %438 = vmatpush1.bf16.msra.mxu0 0
        %439 = vmatprep.subr.bf16.mxu0 0
        %440 = vmatpush1.bf16.msra.mxu0 0
        %441 = vmatprep.subr.bf16.mxu0 0
        %442 = vmatpush1.bf16.msra.mxu0 0
        %443 = vmatprep.mubr.bf16.mxu0 0
        %444 = vmatmul.mubr.bf16.gmra.mrb[0].mxu0 %v358
        %v445 = vpop.f32.mrb[0].mxu0
        %v446 = vadd.f32 0.0, %v445
        %v447 = vpop.f32.mrb[0].mxu0
        %v448 = vpop.f32.mrb[0].mxu0
        %v449 = vpop.f32.mrb[0].mxu0
        %450 = vdwg.mxu0
        %v452 = vsel %vm356, %v340, 0
        %v455 = vsel %vm360, %v331, 0
        %v458 = vsel %vm360, %v339, 0
        %v461 = vsel %vm360, %v338, 0
        %463 = vmatprep.subr.bf16.mxu0 %v458
        %464 = vmatpush1.bf16.msra.mxu0 %v455
        %465 = vmatprep.subr.bf16.mxu0 0
        %466 = vmatpush1.bf16.msra.mxu0 0
        %467 = vmatprep.subr.bf16.mxu0 0
        %468 = vmatpush1.bf16.msra.mxu0 0
        %469 = vmatprep.subr.bf16.mxu0 0
        %470 = vmatpush1.bf16.msra.mxu0 0
        %471 = vmatprep.subr.bf16.mxu0 0
        %472 = vmatpush1.bf16.msra.mxu0 0
        %473 = vmatprep.subr.bf16.mxu0 0
        %474 = vmatpush1.bf16.msra.mxu0 0
        %475 = vmatprep.subr.bf16.mxu0 0
        %476 = vmatpush1.bf16.msra.mxu0 0
        %477 = vmatprep.subr.bf16.mxu0 0
        %478 = vmatpush1.bf16.msra.mxu0 0
        %479 = vmatprep.subr.bf16.mxu0 0
        %480 = vmatpush1.bf16.msra.mxu0 0
        %481 = vmatprep.subr.bf16.mxu0 0
        %482 = vmatpush1.bf16.msra.mxu0 0
        %483 = vmatprep.subr.bf16.mxu0 0
        %484 = vmatpush1.bf16.msra.mxu0 0
        %485 = vmatprep.subr.bf16.mxu0 0
        %486 = vmatpush1.bf16.msra.mxu0 0
        %487 = vmatprep.subr.bf16.mxu0 0
        %488 = vmatpush1.bf16.msra.mxu0 0
        %489 = vmatprep.subr.bf16.mxu0 0
        %490 = vmatpush1.bf16.msra.mxu0 0
        %491 = vmatprep.subr.bf16.mxu0 0
        %492 = vmatpush1.bf16.msra.mxu0 0
        %493 = vmatprep.subr.bf16.mxu0 0
        %494 = vmatpush1.bf16.msra.mxu0 0
        %495 = vmatprep.mubr.bf16.mxu0 0
        %496 = vmatmul.mubr.bf16.gmra.mrb[0].mxu0 %v452
        %v497 = vpop.f32.mrb[0].mxu0
        %v498 = vadd.f32 %v405, %v497
        %v499 = vpop.f32.mrb[0].mxu0
        %v500 = vadd.f32 %v407, %v499
        %v501 = vpop.f32.mrb[0].mxu0
        %v502 = vpop.f32.mrb[0].mxu0
        %503 = vdwg.mxu0
        %504 = vmatprep.subr.bf16.mxu0 0
        %505 = vmatpush1.bf16.msra.mxu0 %v461
        %506 = vmatprep.subr.bf16.mxu0 0
        %507 = vmatpush1.bf16.msra.mxu0 0
        %508 = vmatprep.subr.bf16.mxu0 0
        %509 = vmatpush1.bf16.msra.mxu0 0
        %510 = vmatprep.subr.bf16.mxu0 0
        %511 = vmatpush1.bf16.msra.mxu0 0
        %512 = vmatprep.subr.bf16.mxu0 0
        %513 = vmatpush1.bf16.msra.mxu0 0
        %514 = vmatprep.subr.bf16.mxu0 0
        %515 = vmatpush1.bf16.msra.mxu0 0
        %516 = vmatprep.subr.bf16.mxu0 0
        %517 = vmatpush1.bf16.msra.mxu0 0
        %518 = vmatprep.subr.bf16.mxu0 0
        %519 = vmatpush1.bf16.msra.mxu0 0
        %520 = vmatprep.subr.bf16.mxu0 0
        %521 = vmatpush1.bf16.msra.mxu0 0
        %522 = vmatprep.subr.bf16.mxu0 0
        %523 = vmatpush1.bf16.msra.mxu0 0
        %524 = vmatprep.subr.bf16.mxu0 0
        %525 = vmatpush1.bf16.msra.mxu0 0
        %526 = vmatprep.subr.bf16.mxu0 0
        %527 = vmatpush1.bf16.msra.mxu0 0
        %528 = vmatprep.subr.bf16.mxu0 0
        %529 = vmatpush1.bf16.msra.mxu0 0
        %530 = vmatprep.subr.bf16.mxu0 0
        %531 = vmatpush1.bf16.msra.mxu0 0
        %532 = vmatprep.subr.bf16.mxu0 0
        %533 = vmatpush1.bf16.msra.mxu0 0
        %534 = vmatprep.subr.bf16.mxu0 0
        %535 = vmatpush1.bf16.msra.mxu0 0
        %536 = vmatprep.mubr.bf16.mxu0 0
        %537 = vmatmul.mubr.bf16.gmra.mrb[0].mxu0 %v452
        %v538 = vpop.f32.mrb[0].mxu0
        %v539 = vadd.f32 %v446, %v538
        %v540 = vpop.f32.mrb[0].mxu0
        %v541 = vpop.f32.mrb[0].mxu0
        %v542 = vpop.f32.mrb[0].mxu0
        %543 = vdwg.mxu0
        %s544 = scalar_lea.vmem [#allocation7], 8
        %v545 = vld [vmem:[%s544] sm:$0xf]
        %546 = vrot.lane.b32.xlu0 %v331, 126
        %v547 = vpop.permute.xlu0 %546
        %548 = vrot.lane.b32.xlu0 %v339, 126
        %v549 = vpop.permute.xlu0 %548
        %550 = vrot.lane.b32.xlu0 %v338, 126
        %v551 = vpop.permute.xlu0 %550
        %552 = vrot.lane.b32.xlu0 %v322, 126
        %v553 = vpop.permute.xlu0 %552
        %vm554 = vcmask 1031168
        %v555 = vsel %vm554, %v547, %v549
        %v556 = vsel %vm554, %v549, %v551
        %v557 = vsel %vm554, %v551, %v553
        %v559 = vsel %vm356, %v545, 0
        %v562 = vsel %vm360, %v555, 0
        %v565 = vsel %vm360, %v556, 0
        %v568 = vsel %vm360, %v557, 0
        %570 = vmatprep.subr.bf16.mxu0 %v565
        %571 = vmatpush1.bf16.msra.mxu0 %v562
        %572 = vmatprep.subr.bf16.mxu0 0
        %573 = vmatpush1.bf16.msra.mxu0 0
        %574 = vmatprep.subr.bf16.mxu0 0
        %575 = vmatpush1.bf16.msra.mxu0 0
        %576 = vmatprep.subr.bf16.mxu0 0
        %577 = vmatpush1.bf16.msra.mxu0 0
        %578 = vmatprep.subr.bf16.mxu0 0
        %579 = vmatpush1.bf16.msra.mxu0 0
        %580 = vmatprep.subr.bf16.mxu0 0
        %581 = vmatpush1.bf16.msra.mxu0 0
        %582 = vmatprep.subr.bf16.mxu0 0
        %583 = vmatpush1.bf16.msra.mxu0 0
        %584 = vmatprep.subr.bf16.mxu0 0
        %585 = vmatpush1.bf16.msra.mxu0 0
        %586 = vmatprep.subr.bf16.mxu0 0
        %587 = vmatpush1.bf16.msra.mxu0 0
        %588 = vmatprep.subr.bf16.mxu0 0
        %589 = vmatpush1.bf16.msra.mxu0 0
        %590 = vmatprep.subr.bf16.mxu0 0
        %591 = vmatpush1.bf16.msra.mxu0 0
        %592 = vmatprep.subr.bf16.mxu0 0
        %593 = vmatpush1.bf16.msra.mxu0 0
        %594 = vmatprep.subr.bf16.mxu0 0
        %595 = vmatpush1.bf16.msra.mxu0 0
        %596 = vmatprep.subr.bf16.mxu0 0
        %597 = vmatpush1.bf16.msra.mxu0 0
        %598 = vmatprep.subr.bf16.mxu0 0
        %599 = vmatpush1.bf16.msra.mxu0 0
        %600 = vmatprep.subr.bf16.mxu0 0
        %601 = vmatpush1.bf16.msra.mxu0 0
        %602 = vmatprep.mubr.bf16.mxu0 0
        %603 = vmatmul.mubr.bf16.gmra.mrb[0].mxu0 %v559
        %v604 = vpop.f32.mrb[0].mxu0
        %v605 = vadd.f32 0.0, %v604
        %v606 = vpop.f32.mrb[0].mxu0
        %v607 = vadd.f32 0.0, %v606
        %v608 = vpop.f32.mrb[0].mxu0
        %v609 = vpop.f32.mrb[0].mxu0
        %610 = vdwg.mxu0
        %611 = vmatprep.subr.bf16.mxu0 0
        %612 = vmatpush1.bf16.msra.mxu0 %v568
        %613 = vmatprep.subr.bf16.mxu0 0
        %614 = vmatpush1.bf16.msra.mxu0 0
        %615 = vmatprep.subr.bf16.mxu0 0
        %616 = vmatpush1.bf16.msra.mxu0 0
        %617 = vmatprep.subr.bf16.mxu0 0
        %618 = vmatpush1.bf16.msra.mxu0 0
        %619 = vmatprep.subr.bf16.mxu0 0
        %620 = vmatpush1.bf16.msra.mxu0 0
        %621 = vmatprep.subr.bf16.mxu0 0
        %622 = vmatpush1.bf16.msra.mxu0 0
        %623 = vmatprep.subr.bf16.mxu0 0
        %624 = vmatpush1.bf16.msra.mxu0 0
        %625 = vmatprep.subr.bf16.mxu0 0
        %626 = vmatpush1.bf16.msra.mxu0 0
        %627 = vmatprep.subr.bf16.mxu0 0
        %628 = vmatpush1.bf16.msra.mxu0 0
        %629 = vmatprep.subr.bf16.mxu0 0
        %630 = vmatpush1.bf16.msra.mxu0 0
        %631 = vmatprep.subr.bf16.mxu0 0
        %632 = vmatpush1.bf16.msra.mxu0 0
        %633 = vmatprep.subr.bf16.mxu0 0
        %634 = vmatpush1.bf16.msra.mxu0 0
        %635 = vmatprep.subr.bf16.mxu0 0
        %636 = vmatpush1.bf16.msra.mxu0 0
        %637 = vmatprep.subr.bf16.mxu0 0
        %638 = vmatpush1.bf16.msra.mxu0 0
        %639 = vmatprep.subr.bf16.mxu0 0
        %640 = vmatpush1.bf16.msra.mxu0 0
        %641 = vmatprep.subr.bf16.mxu0 0
        %642 = vmatpush1.bf16.msra.mxu0 0
        %643 = vmatprep.mubr.bf16.mxu0 0
        %644 = vmatmul.mubr.bf16.gmra.mrb[0].mxu0 %v559
        %v645 = vpop.f32.mrb[0].mxu0
        %v646 = vadd.f32 0.0, %v645
        %v647 = vpop.f32.mrb[0].mxu0
        %v648 = vpop.f32.mrb[0].mxu0
        %v649 = vpop.f32.mrb[0].mxu0
        %650 = vdwg.mxu0
        %v651 = vadd.f32 %v498, %v605
        %v652 = vadd.f32 %v500, %v607
        %v653 = vadd.f32 %v539, %v646
        %s654 = scalar_lea.vmem [#allocation7], 12
        %v655 = vld [vmem:[%s654] sm:$0xf]
        %656 = vrot.lane.b32.xlu0 %v331, 110
        %v657 = vpop.permute.xlu0 %656
        %658 = vrot.lane.b32.xlu0 %v339, 110
        %v659 = vpop.permute.xlu0 %658
        %660 = vrot.lane.b32.xlu0 %v338, 110
        %v661 = vpop.permute.xlu0 %660
        %662 = vrot.lane.b32.xlu0 %v322, 110
        %v663 = vpop.permute.xlu0 %662
        %vm664 = vcmask 900096
        %v665 = vsel %vm664, %v657, %v659
        %v666 = vsel %vm664, %v659, %v661
        %v667 = vsel %vm664, %v661, %v663
        %v669 = vsel %vm356, %v655, 0
        %v672 = vsel %vm360, %v665, 0
        %v675 = vsel %vm360, %v666, 0
        %v678 = vsel %vm360, %v667, 0
        %680 = vmatprep.subr.bf16.mxu0 %v675
        %681 = vmatpush1.bf16.msra.mxu0 %v672
        %682 = vmatprep.subr.bf16.mxu0 0
        %683 = vmatpush1.bf16.msra.mxu0 0
        %684 = vmatprep.subr.bf16.mxu0 0
        %685 = vmatpush1.bf16.msra.mxu0 0
        %686 = vmatprep.subr.bf16.mxu0 0
        %687 = vmatpush1.bf16.msra.mxu0 0
        %688 = vmatprep.subr.bf16.mxu0 0
        %689 = vmatpush1.bf16.msra.mxu0 0
        %690 = vmatprep.subr.bf16.mxu0 0
        %691 = vmatpush1.bf16.msra.mxu0 0
        %692 = vmatprep.subr.bf16.mxu0 0
        %693 = vmatpush1.bf16.msra.mxu0 0
        %694 = vmatprep.subr.bf16.mxu0 0
        %695 = vmatpush1.bf16.msra.mxu0 0
        %696 = vmatprep.subr.bf16.mxu0 0
        %697 = vmatpush1.bf16.msra.mxu0 0
        %698 = vmatprep.subr.bf16.mxu0 0
        %699 = vmatpush1.bf16.msra.mxu0 0
        %700 = vmatprep.subr.bf16.mxu0 0
        %701 = vmatpush1.bf16.msra.mxu0 0
        %702 = vmatprep.subr.bf16.mxu0 0
        %703 = vmatpush1.bf16.msra.mxu0 0
        %704 = vmatprep.subr.bf16.mxu0 0
        %705 = vmatpush1.bf16.msra.mxu0 0
        %706 = vmatprep.subr.bf16.mxu0 0
        %707 = vmatpush1.bf16.msra.mxu0 0
        %708 = vmatprep.subr.bf16.mxu0 0
        %709 = vmatpush1.bf16.msra.mxu0 0
        %710 = vmatprep.subr.bf16.mxu0 0
        %711 = vmatpush1.bf16.msra.mxu0 0
        %712 = vmatprep.mubr.bf16.mxu0 0
        %713 = vmatmul.mubr.bf16.gmra.mrb[0].mxu0 %v669
        %v714 = vpop.f32.mrb[0].mxu0
        %v715 = vadd.f32 0.0, %v714
        %v716 = vpop.f32.mrb[0].mxu0
        %v717 = vadd.f32 0.0, %v716
        %v718 = vpop.f32.mrb[0].mxu0
        %v719 = vpop.f32.mrb[0].mxu0
        %720 = vdwg.mxu0
        %721 = vmatprep.subr.bf16.mxu0 0
        %722 = vmatpush1.bf16.msra.mxu0 %v678
        %723 = vmatprep.subr.bf16.mxu0 0
        %724 = vmatpush1.bf16.msra.mxu0 0
        %725 = vmatprep.subr.bf16.mxu0 0
        %726 = vmatpush1.bf16.msra.mxu0 0
        %727 = vmatprep.subr.bf16.mxu0 0
        %728 = vmatpush1.bf16.msra.mxu0 0
        %729 = vmatprep.subr.bf16.mxu0 0
        %730 = vmatpush1.bf16.msra.mxu0 0
        %731 = vmatprep.subr.bf16.mxu0 0
        %732 = vmatpush1.bf16.msra.mxu0 0
        %733 = vmatprep.subr.bf16.mxu0 0
        %734 = vmatpush1.bf16.msra.mxu0 0
        %735 = vmatprep.subr.bf16.mxu0 0
        %736 = vmatpush1.bf16.msra.mxu0 0
        %737 = vmatprep.subr.bf16.mxu0 0
        %738 = vmatpush1.bf16.msra.mxu0 0
        %739 = vmatprep.subr.bf16.mxu0 0
        %740 = vmatpush1.bf16.msra.mxu0 0
        %741 = vmatprep.subr.bf16.mxu0 0
        %742 = vmatpush1.bf16.msra.mxu0 0
        %743 = vmatprep.subr.bf16.mxu0 0
        %744 = vmatpush1.bf16.msra.mxu0 0
        %745 = vmatprep.subr.bf16.mxu0 0
        %746 = vmatpush1.bf16.msra.mxu0 0
        %747 = vmatprep.subr.bf16.mxu0 0
        %748 = vmatpush1.bf16.msra.mxu0 0
        %749 = vmatprep.subr.bf16.mxu0 0
        %750 = vmatpush1.bf16.msra.mxu0 0
        %751 = vmatprep.subr.bf16.mxu0 0
        %752 = vmatpush1.bf16.msra.mxu0 0
        %753 = vmatprep.mubr.bf16.mxu0 0
        %754 = vmatmul.mubr.bf16.gmra.mrb[0].mxu0 %v669
        %v755 = vpop.f32.mrb[0].mxu0
        %v756 = vadd.f32 0.0, %v755
        %v757 = vpop.f32.mrb[0].mxu0
        %v758 = vpop.f32.mrb[0].mxu0
        %v759 = vpop.f32.mrb[0].mxu0
        %760 = vdwg.mxu0
        %v761 = vadd.f32 %v651, %v715
        %v762 = vadd.f32 %v652, %v717
        %v763 = vadd.f32 %v653, %v756
        %s764 = scalar_lea.vmem [#allocation7], 16
        %v765 = vld [vmem:[%s764] sm:$0xf]
        %766 = vrot.lane.b32.xlu0 %v331, 109
        %v767 = vpop.permute.xlu0 %766
        %768 = vrot.lane.b32.xlu0 %v339, 109
        %v769 = vpop.permute.xlu0 %768
        %770 = vrot.lane.b32.xlu0 %v338, 109
        %v771 = vpop.permute.xlu0 %770
        %772 = vrot.lane.b32.xlu0 %v322, 109
        %v773 = vpop.permute.xlu0 %772
        %vm774 = vcmask 891904
        %v775 = vsel %vm774, %v767, %v769
        %v776 = vsel %vm774, %v769, %v771
        %v777 = vsel %vm774, %v771, %v773
        %v779 = vsel %vm356, %v765, 0
        %v782 = vsel %vm360, %v775, 0
        %v785 = vsel %vm360, %v776, 0
        %v788 = vsel %vm360, %v777, 0
        %790 = vmatprep.subr.bf16.mxu0 %v785
        %791 = vmatpush1.bf16.msra.mxu0 %v782
        %792 = vmatprep.subr.bf16.mxu0 0
        %793 = vmatpush1.bf16.msra.mxu0 0
        %794 = vmatprep.subr.bf16.mxu0 0
        %795 = vmatpush1.bf16.msra.mxu0 0
        %796 = vmatprep.subr.bf16.mxu0 0
        %797 = vmatpush1.bf16.msra.mxu0 0
        %798 = vmatprep.subr.bf16.mxu0 0
        %799 = vmatpush1.bf16.msra.mxu0 0
        %800 = vmatprep.subr.bf16.mxu0 0
        %801 = vmatpush1.bf16.msra.mxu0 0
        %802 = vmatprep.subr.bf16.mxu0 0
        %803 = vmatpush1.bf16.msra.mxu0 0
        %804 = vmatprep.subr.bf16.mxu0 0
        %805 = vmatpush1.bf16.msra.mxu0 0
        %806 = vmatprep.subr.bf16.mxu0 0
        %807 = vmatpush1.bf16.msra.mxu0 0
        %808 = vmatprep.subr.bf16.mxu0 0
        %809 = vmatpush1.bf16.msra.mxu0 0
        %810 = vmatprep.subr.bf16.mxu0 0
        %811 = vmatpush1.bf16.msra.mxu0 0
        %812 = vmatprep.subr.bf16.mxu0 0
        %813 = vmatpush1.bf16.msra.mxu0 0
        %814 = vmatprep.subr.bf16.mxu0 0
        %815 = vmatpush1.bf16.msra.mxu0 0
        %816 = vmatprep.subr.bf16.mxu0 0
        %817 = vmatpush1.bf16.msra.mxu0 0
        %818 = vmatprep.subr.bf16.mxu0 0
        %819 = vmatpush1.bf16.msra.mxu0 0
        %820 = vmatprep.subr.bf16.mxu0 0
        %821 = vmatpush1.bf16.msra.mxu0 0
        %822 = vmatprep.mubr.bf16.mxu0 0
        %823 = vmatmul.mubr.bf16.gmra.mrb[0].mxu0 %v779
        %v824 = vpop.f32.mrb[0].mxu0
        %v825 = vadd.f32 0.0, %v824
        %v826 = vpop.f32.mrb[0].mxu0
        %v827 = vadd.f32 0.0, %v826
        %v828 = vpop.f32.mrb[0].mxu0
        %v829 = vpop.f32.mrb[0].mxu0
        %830 = vdwg.mxu0
        %831 = vmatprep.subr.bf16.mxu0 0
        %832 = vmatpush1.bf16.msra.mxu0 %v788
        %833 = vmatprep.subr.bf16.mxu0 0
        %834 = vmatpush1.bf16.msra.mxu0 0
        %835 = vmatprep.subr.bf16.mxu0 0
        %836 = vmatpush1.bf16.msra.mxu0 0
        %837 = vmatprep.subr.bf16.mxu0 0
        %838 = vmatpush1.bf16.msra.mxu0 0
        %839 = vmatprep.subr.bf16.mxu0 0
        %840 = vmatpush1.bf16.msra.mxu0 0
        %841 = vmatprep.subr.bf16.mxu0 0
        %842 = vmatpush1.bf16.msra.mxu0 0
        %843 = vmatprep.subr.bf16.mxu0 0
        %844 = vmatpush1.bf16.msra.mxu0 0
        %845 = vmatprep.subr.bf16.mxu0 0
        %846 = vmatpush1.bf16.msra.mxu0 0
        %847 = vmatprep.subr.bf16.mxu0 0
        %848 = vmatpush1.bf16.msra.mxu0 0
        %849 = vmatprep.subr.bf16.mxu0 0
        %850 = vmatpush1.bf16.msra.mxu0 0
        %851 = vmatprep.subr.bf16.mxu0 0
        %852 = vmatpush1.bf16.msra.mxu0 0
        %853 = vmatprep.subr.bf16.mxu0 0
        %854 = vmatpush1.bf16.msra.mxu0 0
        %855 = vmatprep.subr.bf16.mxu0 0
        %856 = vmatpush1.bf16.msra.mxu0 0
        %857 = vmatprep.subr.bf16.mxu0 0
        %858 = vmatpush1.bf16.msra.mxu0 0
        %859 = vmatprep.subr.bf16.mxu0 0
        %860 = vmatpush1.bf16.msra.mxu0 0
        %861 = vmatprep.subr.bf16.mxu0 0
        %862 = vmatpush1.bf16.msra.mxu0 0
        %863 = vmatprep.mubr.bf16.mxu0 0
        %864 = vmatmul.mubr.bf16.gmra.mrb[0].mxu0 %v779
        %v865 = vpop.f32.mrb[0].mxu0
        %v866 = vadd.f32 0.0, %v865
        %v867 = vpop.f32.mrb[0].mxu0
        %v868 = vpop.f32.mrb[0].mxu0
        %v869 = vpop.f32.mrb[0].mxu0
        %870 = vdwg.mxu0
        %v871 = vadd.f32 %v761, %v825
        %v872 = vadd.f32 %v762, %v827
        %v873 = vadd.f32 %v763, %v866
        %s874 = scalar_lea.vmem [#allocation7], 20
        %v875 = vld [vmem:[%s874] sm:$0xf]
        %876 = vrot.lane.b32.xlu0 %v331, 108
        %v877 = vpop.permute.xlu0 %876
        %878 = vrot.lane.b32.xlu0 %v339, 108
        %v879 = vpop.permute.xlu0 %878
        %880 = vrot.lane.b32.xlu0 %v338, 108
        %v881 = vpop.permute.xlu0 %880
        %882 = vrot.lane.b32.xlu0 %v322, 108
        %v883 = vpop.permute.xlu0 %882
        %vm884 = vcmask 883712
        %v885 = vsel %vm884, %v877, %v879
        %v886 = vsel %vm884, %v879, %v881
        %v887 = vsel %vm884, %v881, %v883
        %v889 = vsel %vm356, %v875, 0
        %v892 = vsel %vm360, %v885, 0
        %v895 = vsel %vm360, %v886, 0
        %v898 = vsel %vm360, %v887, 0
        %900 = vmatprep.subr.bf16.mxu0 %v895
        %901 = vmatpush1.bf16.msra.mxu0 %v892
        %902 = vmatprep.subr.bf16.mxu0 0
        %903 = vmatpush1.bf16.msra.mxu0 0
        %904 = vmatprep.subr.bf16.mxu0 0
        %905 = vmatpush1.bf16.msra.mxu0 0
        %906 = vmatprep.subr.bf16.mxu0 0
        %907 = vmatpush1.bf16.msra.mxu0 0
        %908 = vmatprep.subr.bf16.mxu0 0
        %909 = vmatpush1.bf16.msra.mxu0 0
        %910 = vmatprep.subr.bf16.mxu0 0
        %911 = vmatpush1.bf16.msra.mxu0 0
        %912 = vmatprep.subr.bf16.mxu0 0
        %913 = vmatpush1.bf16.msra.mxu0 0
        %914 = vmatprep.subr.bf16.mxu0 0
        %915 = vmatpush1.bf16.msra.mxu0 0
        %916 = vmatprep.subr.bf16.mxu0 0
        %917 = vmatpush1.bf16.msra.mxu0 0
        %918 = vmatprep.subr.bf16.mxu0 0
        %919 = vmatpush1.bf16.msra.mxu0 0
        %920 = vmatprep.subr.bf16.mxu0 0
        %921 = vmatpush1.bf16.msra.mxu0 0
        %922 = vmatprep.subr.bf16.mxu0 0
        %923 = vmatpush1.bf16.msra.mxu0 0
        %924 = vmatprep.subr.bf16.mxu0 0
        %925 = vmatpush1.bf16.msra.mxu0 0
        %926 = vmatprep.subr.bf16.mxu0 0
        %927 = vmatpush1.bf16.msra.mxu0 0
        %928 = vmatprep.subr.bf16.mxu0 0
        %929 = vmatpush1.bf16.msra.mxu0 0
        %930 = vmatprep.subr.bf16.mxu0 0
        %931 = vmatpush1.bf16.msra.mxu0 0
        %932 = vmatprep.mubr.bf16.mxu0 0
        %933 = vmatmul.mubr.bf16.gmra.mrb[0].mxu0 %v889
        %v934 = vpop.f32.mrb[0].mxu0
        %v935 = vadd.f32 0.0, %v934
        %v936 = vpop.f32.mrb[0].mxu0
        %v937 = vadd.f32 0.0, %v936
        %v938 = vpop.f32.mrb[0].mxu0
        %v939 = vpop.f32.mrb[0].mxu0
        %940 = vdwg.mxu0
        %941 = vmatprep.subr.bf16.mxu0 0
        %942 = vmatpush1.bf16.msra.mxu0 %v898
        %943 = vmatprep.subr.bf16.mxu0 0
        %944 = vmatpush1.bf16.msra.mxu0 0
        %945 = vmatprep.subr.bf16.mxu0 0
        %946 = vmatpush1.bf16.msra.mxu0 0
        %947 = vmatprep.subr.bf16.mxu0 0
        %948 = vmatpush1.bf16.msra.mxu0 0
        %949 = vmatprep.subr.bf16.mxu0 0
        %950 = vmatpush1.bf16.msra.mxu0 0
        %951 = vmatprep.subr.bf16.mxu0 0
        %952 = vmatpush1.bf16.msra.mxu0 0
        %953 = vmatprep.subr.bf16.mxu0 0
        %954 = vmatpush1.bf16.msra.mxu0 0
        %955 = vmatprep.subr.bf16.mxu0 0
        %956 = vmatpush1.bf16.msra.mxu0 0
        %957 = vmatprep.subr.bf16.mxu0 0
        %958 = vmatpush1.bf16.msra.mxu0 0
        %959 = vmatprep.subr.bf16.mxu0 0
        %960 = vmatpush1.bf16.msra.mxu0 0
        %961 = vmatprep.subr.bf16.mxu0 0
        %962 = vmatpush1.bf16.msra.mxu0 0
        %963 = vmatprep.subr.bf16.mxu0 0
        %964 = vmatpush1.bf16.msra.mxu0 0
        %965 = vmatprep.subr.bf16.mxu0 0
        %966 = vmatpush1.bf16.msra.mxu0 0
        %967 = vmatprep.subr.bf16.mxu0 0
        %968 = vmatpush1.bf16.msra.mxu0 0
        %969 = vmatprep.subr.bf16.mxu0 0
        %970 = vmatpush1.bf16.msra.mxu0 0
        %971 = vmatprep.subr.bf16.mxu0 0
        %972 = vmatpush1.bf16.msra.mxu0 0
        %973 = vmatprep.mubr.bf16.mxu0 0
        %974 = vmatmul.mubr.bf16.gmra.mrb[0].mxu0 %v889
        %v975 = vpop.f32.mrb[0].mxu0
        %v976 = vadd.f32 0.0, %v975
        %v977 = vpop.f32.mrb[0].mxu0
        %v978 = vpop.f32.mrb[0].mxu0
        %v979 = vpop.f32.mrb[0].mxu0
        %980 = vdwg.mxu0
        %v981 = vadd.f32 %v871, %v935
        %v982 = vadd.f32 %v872, %v937
        %v983 = vadd.f32 %v873, %v976
        %s984 = scalar_lea.vmem [#allocation7], 24
        %v985 = vld [vmem:[%s984] sm:$0xf]
        %986 = vrot.lane.b32.xlu0 %v331, 92
        %v987 = vpop.permute.xlu0 %986
        %988 = vrot.lane.b32.xlu0 %v339, 92
        %v989 = vpop.permute.xlu0 %988
        %990 = vrot.lane.b32.xlu0 %v338, 92
        %v991 = vpop.permute.xlu0 %990
        %992 = vrot.lane.b32.xlu0 %v322, 92
        %v993 = vpop.permute.xlu0 %992
        %vm994 = vcmask 752640
        %v995 = vsel %vm994, %v987, %v989
        %v996 = vsel %vm994, %v989, %v991
        %v997 = vsel %vm994, %v991, %v993
        %v999 = vsel %vm356, %v985, 0
        %v1002 = vsel %vm360, %v995, 0
        %v1005 = vsel %vm360, %v996, 0
        %v1008 = vsel %vm360, %v997, 0
        %1010 = vmatprep.subr.bf16.mxu0 %v1005
        %1011 = vmatpush1.bf16.msra.mxu0 %v1002
        %1012 = vmatprep.subr.bf16.mxu0 0
        %1013 = vmatpush1.bf16.msra.mxu0 0
        %1014 = vmatprep.subr.bf16.mxu0 0
        %1015 = vmatpush1.bf16.msra.mxu0 0
        %1016 = vmatprep.subr.bf16.mxu0 0
        %1017 = vmatpush1.bf16.msra.mxu0 0
        %1018 = vmatprep.subr.bf16.mxu0 0
        %1019 = vmatpush1.bf16.msra.mxu0 0
        %1020 = vmatprep.subr.bf16.mxu0 0
        %1021 = vmatpush1.bf16.msra.mxu0 0
        %1022 = vmatprep.subr.bf16.mxu0 0
        %1023 = vmatpush1.bf16.msra.mxu0 0
        %1024 = vmatprep.subr.bf16.mxu0 0
        %1025 = vmatpush1.bf16.msra.mxu0 0
        %1026 = vmatprep.subr.bf16.mxu0 0
        %1027 = vmatpush1.bf16.msra.mxu0 0
        %1028 = vmatprep.subr.bf16.mxu0 0
        %1029 = vmatpush1.bf16.msra.mxu0 0
        %1030 = vmatprep.subr.bf16.mxu0 0
        %1031 = vmatpush1.bf16.msra.mxu0 0
        %1032 = vmatprep.subr.bf16.mxu0 0
        %1033 = vmatpush1.bf16.msra.mxu0 0
        %1034 = vmatprep.subr.bf16.mxu0 0
        %1035 = vmatpush1.bf16.msra.mxu0 0
        %1036 = vmatprep.subr.bf16.mxu0 0
        %1037 = vmatpush1.bf16.msra.mxu0 0
        %1038 = vmatprep.subr.bf16.mxu0 0
        %1039 = vmatpush1.bf16.msra.mxu0 0
        %1040 = vmatprep.subr.bf16.mxu0 0
        %1041 = vmatpush1.bf16.msra.mxu0 0
        %1042 = vmatprep.mubr.bf16.mxu0 0
        %1043 = vmatmul.mubr.bf16.gmra.mrb[0].mxu0 %v999
        %v1044 = vpop.f32.mrb[0].mxu0
        %v1045 = vadd.f32 0.0, %v1044
        %v1046 = vpop.f32.mrb[0].mxu0
        %v1047 = vadd.f32 0.0, %v1046
        %v1048 = vpop.f32.mrb[0].mxu0
        %v1049 = vpop.f32.mrb[0].mxu0
        %1050 = vdwg.mxu0
        %1051 = vmatprep.subr.bf16.mxu0 0
        %1052 = vmatpush1.bf16.msra.mxu0 %v1008
        %1053 = vmatprep.subr.bf16.mxu0 0
        %1054 = vmatpush1.bf16.msra.mxu0 0
        %1055 = vmatprep.subr.bf16.mxu0 0
        %1056 = vmatpush1.bf16.msra.mxu0 0
        %1057 = vmatprep.subr.bf16.mxu0 0
        %1058 = vmatpush1.bf16.msra.mxu0 0
        %1059 = vmatprep.subr.bf16.mxu0 0
        %1060 = vmatpush1.bf16.msra.mxu0 0
        %1061 = vmatprep.subr.bf16.mxu0 0
        %1062 = vmatpush1.bf16.msra.mxu0 0
        %1063 = vmatprep.subr.bf16.mxu0 0
        %1064 = vmatpush1.bf16.msra.mxu0 0
        %1065 = vmatprep.subr.bf16.mxu0 0
        %1066 = vmatpush1.bf16.msra.mxu0 0
        %1067 = vmatprep.subr.bf16.mxu0 0
        %1068 = vmatpush1.bf16.msra.mxu0 0
        %1069 = vmatprep.subr.bf16.mxu0 0
        %1070 = vmatpush1.bf16.msra.mxu0 0
        %1071 = vmatprep.subr.bf16.mxu0 0
        %1072 = vmatpush1.bf16.msra.mxu0 0
        %1073 = vmatprep.subr.bf16.mxu0 0
        %1074 = vmatpush1.bf16.msra.mxu0 0
        %1075 = vmatprep.subr.bf16.mxu0 0
        %1076 = vmatpush1.bf16.msra.mxu0 0
        %1077 = vmatprep.subr.bf16.mxu0 0
        %1078 = vmatpush1.bf16.msra.mxu0 0
        %1079 = vmatprep.subr.bf16.mxu0 0
        %1080 = vmatpush1.bf16.msra.mxu0 0
        %1081 = vmatprep.subr.bf16.mxu0 0
        %1082 = vmatpush1.bf16.msra.mxu0 0
        %1083 = vmatprep.mubr.bf16.mxu0 0
        %1084 = vmatmul.mubr.bf16.gmra.mrb[0].mxu0 %v999
        %v1085 = vpop.f32.mrb[0].mxu0
        %v1086 = vadd.f32 0.0, %v1085
        %v1087 = vpop.f32.mrb[0].mxu0
        %v1088 = vpop.f32.mrb[0].mxu0
        %v1089 = vpop.f32.mrb[0].mxu0
        %1090 = vdwg.mxu0
        %v1091 = vadd.f32 %v981, %v1045
        %v1092 = vadd.f32 %v982, %v1047
        %v1093 = vadd.f32 %v983, %v1086
        %s1094 = scalar_lea.vmem [#allocation7], 28
        %v1095 = vld [vmem:[%s1094] sm:$0xf]
        %1096 = vrot.lane.b32.xlu0 %v331, 91
        %v1097 = vpop.permute.xlu0 %1096
        %1098 = vrot.lane.b32.xlu0 %v339, 91
        %v1099 = vpop.permute.xlu0 %1098
        %1100 = vrot.lane.b32.xlu0 %v338, 91
        %v1101 = vpop.permute.xlu0 %1100
        %1102 = vrot.lane.b32.xlu0 %v322, 91
        %v1103 = vpop.permute.xlu0 %1102
        %vm1104 = vcmask 744448
        %v1105 = vsel %vm1104, %v1097, %v1099
        %v1106 = vsel %vm1104, %v1099, %v1101
        %v1107 = vsel %vm1104, %v1101, %v1103
        %v1109 = vsel %vm356, %v1095, 0
        %v1112 = vsel %vm360, %v1105, 0
        %v1115 = vsel %vm360, %v1106, 0
        %v1118 = vsel %vm360, %v1107, 0
        %1120 = vmatprep.subr.bf16.mxu0 %v1115
        %1121 = vmatpush1.bf16.msra.mxu0 %v1112
        %1122 = vmatprep.subr.bf16.mxu0 0
        %1123 = vmatpush1.bf16.msra.mxu0 0
        %1124 = vmatprep.subr.bf16.mxu0 0
        %1125 = vmatpush1.bf16.msra.mxu0 0
        %1126 = vmatprep.subr.bf16.mxu0 0
        %1127 = vmatpush1.bf16.msra.mxu0 0
        %1128 = vmatprep.subr.bf16.mxu0 0
        %1129 = vmatpush1.bf16.msra.mxu0 0
        %1130 = vmatprep.subr.bf16.mxu0 0
        %1131 = vmatpush1.bf16.msra.mxu0 0
        %1132 = vmatprep.subr.bf16.mxu0 0
        %1133 = vmatpush1.bf16.msra.mxu0 0
        %1134 = vmatprep.subr.bf16.mxu0 0
        %1135 = vmatpush1.bf16.msra.mxu0 0
        %1136 = vmatprep.subr.bf16.mxu0 0
        %1137 = vmatpush1.bf16.msra.mxu0 0
        %1138 = vmatprep.subr.bf16.mxu0 0
        %1139 = vmatpush1.bf16.msra.mxu0 0
        %1140 = vmatprep.subr.bf16.mxu0 0
        %1141 = vmatpush1.bf16.msra.mxu0 0
        %1142 = vmatprep.subr.bf16.mxu0 0
        %1143 = vmatpush1.bf16.msra.mxu0 0
        %1144 = vmatprep.subr.bf16.mxu0 0
        %1145 = vmatpush1.bf16.msra.mxu0 0
        %1146 = vmatprep.subr.bf16.mxu0 0
        %1147 = vmatpush1.bf16.msra.mxu0 0
        %1148 = vmatprep.subr.bf16.mxu0 0
        %1149 = vmatpush1.bf16.msra.mxu0 0
        %1150 = vmatprep.subr.bf16.mxu0 0
        %1151 = vmatpush1.bf16.msra.mxu0 0
        %1152 = vmatprep.mubr.bf16.mxu0 0
        %1153 = vmatmul.mubr.bf16.gmra.mrb[0].mxu0 %v1109
        %v1154 = vpop.f32.mrb[0].mxu0
        %v1155 = vadd.f32 0.0, %v1154
        %v1156 = vpop.f32.mrb[0].mxu0
        %v1157 = vadd.f32 0.0, %v1156
        %v1158 = vpop.f32.mrb[0].mxu0
        %v1159 = vpop.f32.mrb[0].mxu0
        %1160 = vdwg.mxu0
        %1161 = vmatprep.subr.bf16.mxu0 0
        %1162 = vmatpush1.bf16.msra.mxu0 %v1118
        %1163 = vmatprep.subr.bf16.mxu0 0
        %1164 = vmatpush1.bf16.msra.mxu0 0
        %1165 = vmatprep.subr.bf16.mxu0 0
        %1166 = vmatpush1.bf16.msra.mxu0 0
        %1167 = vmatprep.subr.bf16.mxu0 0
        %1168 = vmatpush1.bf16.msra.mxu0 0
        %1169 = vmatprep.subr.bf16.mxu0 0
        %1170 = vmatpush1.bf16.msra.mxu0 0
        %1171 = vmatprep.subr.bf16.mxu0 0
        %1172 = vmatpush1.bf16.msra.mxu0 0
        %1173 = vmatprep.subr.bf16.mxu0 0
        %1174 = vmatpush1.bf16.msra.mxu0 0
        %1175 = vmatprep.subr.bf16.mxu0 0
        %1176 = vmatpush1.bf16.msra.mxu0 0
        %1177 = vmatprep.subr.bf16.mxu0 0
        %1178 = vmatpush1.bf16.msra.mxu0 0
        %1179 = vmatprep.subr.bf16.mxu0 0
        %1180 = vmatpush1.bf16.msra.mxu0 0
        %1181 = vmatprep.subr.bf16.mxu0 0
        %1182 = vmatpush1.bf16.msra.mxu0 0
        %1183 = vmatprep.subr.bf16.mxu0 0
        %1184 = vmatpush1.bf16.msra.mxu0 0
        %1185 = vmatprep.subr.bf16.mxu0 0
        %1186 = vmatpush1.bf16.msra.mxu0 0
        %1187 = vmatprep.subr.bf16.mxu0 0
        %1188 = vmatpush1.bf16.msra.mxu0 0
        %1189 = vmatprep.subr.bf16.mxu0 0
        %1190 = vmatpush1.bf16.msra.mxu0 0
        %1191 = vmatprep.subr.bf16.mxu0 0
        %1192 = vmatpush1.bf16.msra.mxu0 0
        %1193 = vmatprep.mubr.bf16.mxu0 0
        %1194 = vmatmul.mubr.bf16.gmra.mrb[0].mxu0 %v1109
        %v1195 = vpop.f32.mrb[0].mxu0
        %v1196 = vadd.f32 0.0, %v1195
        %v1197 = vpop.f32.mrb[0].mxu0
        %v1198 = vpop.f32.mrb[0].mxu0
        %v1199 = vpop.f32.mrb[0].mxu0
        %1200 = vdwg.mxu0
        %v1201 = vadd.f32 %v1091, %v1155
        %v1202 = vadd.f32 %v1092, %v1157
        %v1203 = vadd.f32 %v1093, %v1196
        %s1204 = scalar_lea.vmem [#allocation7], 32
        %v1205 = vld [vmem:[%s1204] sm:$0xf]
        %1206 = vrot.lane.b32.xlu0 %v331, 90
        %v1207 = vpop.permute.xlu0 %1206
        %1208 = vrot.lane.b32.xlu0 %v339, 90
        %v1209 = vpop.permute.xlu0 %1208
        %1210 = vrot.lane.b32.xlu0 %v338, 90
        %v1211 = vpop.permute.xlu0 %1210
        %1212 = vrot.lane.b32.xlu0 %v322, 90
        %v1213 = vpop.permute.xlu0 %1212
        %vm1214 = vcmask 736256
        %v1215 = vsel %vm1214, %v1207, %v1209
        %v1216 = vsel %vm1214, %v1209, %v1211
        %v1217 = vsel %vm1214, %v1211, %v1213
        %v1219 = vsel %vm356, %v1205, 0
        %v1222 = vsel %vm360, %v1215, 0
        %v1225 = vsel %vm360, %v1216, 0
        %v1228 = vsel %vm360, %v1217, 0
        %1230 = vmatprep.subr.bf16.mxu0 %v1225
        %1231 = vmatpush1.bf16.msra.mxu0 %v1222
        %1232 = vmatprep.subr.bf16.mxu0 0
        %1233 = vmatpush1.bf16.msra.mxu0 0
        %1234 = vmatprep.subr.bf16.mxu0 0
        %1235 = vmatpush1.bf16.msra.mxu0 0
        %1236 = vmatprep.subr.bf16.mxu0 0
        %1237 = vmatpush1.bf16.msra.mxu0 0
        %1238 = vmatprep.subr.bf16.mxu0 0
        %1239 = vmatpush1.bf16.msra.mxu0 0
        %1240 = vmatprep.subr.bf16.mxu0 0
        %1241 = vmatpush1.bf16.msra.mxu0 0
        %1242 = vmatprep.subr.bf16.mxu0 0
        %1243 = vmatpush1.bf16.msra.mxu0 0
        %1244 = vmatprep.subr.bf16.mxu0 0
        %1245 = vmatpush1.bf16.msra.mxu0 0
        %1246 = vmatprep.subr.bf16.mxu0 0
        %1247 = vmatpush1.bf16.msra.mxu0 0
        %1248 = vmatprep.subr.bf16.mxu0 0
        %1249 = vmatpush1.bf16.msra.mxu0 0
        %1250 = vmatprep.subr.bf16.mxu0 0
        %1251 = vmatpush1.bf16.msra.mxu0 0
        %1252 = vmatprep.subr.bf16.mxu0 0
        %1253 = vmatpush1.bf16.msra.mxu0 0
        %1254 = vmatprep.subr.bf16.mxu0 0
        %1255 = vmatpush1.bf16.msra.mxu0 0
        %1256 = vmatprep.subr.bf16.mxu0 0
        %1257 = vmatpush1.bf16.msra.mxu0 0
        %1258 = vmatprep.subr.bf16.mxu0 0
        %1259 = vmatpush1.bf16.msra.mxu0 0
        %1260 = vmatprep.subr.bf16.mxu0 0
        %1261 = vmatpush1.bf16.msra.mxu0 0
        %1262 = vmatprep.mubr.bf16.mxu0 0
        %1263 = vmatmul.mubr.bf16.gmra.mrb[0].mxu0 %v1219
        %v1264 = vpop.f32.mrb[0].mxu0
        %v1265 = vadd.f32 0.0, %v1264
        %v1266 = vpop.f32.mrb[0].mxu0
        %v1267 = vadd.f32 0.0, %v1266
        %v1268 = vpop.f32.mrb[0].mxu0
        %v1269 = vpop.f32.mrb[0].mxu0
        %1270 = vdwg.mxu0
        %1271 = vmatprep.subr.bf16.mxu0 0
        %1272 = vmatpush1.bf16.msra.mxu0 %v1228
        %1273 = vmatprep.subr.bf16.mxu0 0
        %1274 = vmatpush1.bf16.msra.mxu0 0
        %1275 = vmatprep.subr.bf16.mxu0 0
        %1276 = vmatpush1.bf16.msra.mxu0 0
        %1277 = vmatprep.subr.bf16.mxu0 0
        %1278 = vmatpush1.bf16.msra.mxu0 0
        %1279 = vmatprep.subr.bf16.mxu0 0
        %1280 = vmatpush1.bf16.msra.mxu0 0
        %1281 = vmatprep.subr.bf16.mxu0 0
        %1282 = vmatpush1.bf16.msra.mxu0 0
        %1283 = vmatprep.subr.bf16.mxu0 0
        %1284 = vmatpush1.bf16.msra.mxu0 0
        %1285 = vmatprep.subr.bf16.mxu0 0
        %1286 = vmatpush1.bf16.msra.mxu0 0
        %1287 = vmatprep.subr.bf16.mxu0 0
        %1288 = vmatpush1.bf16.msra.mxu0 0
        %1289 = vmatprep.subr.bf16.mxu0 0
        %1290 = vmatpush1.bf16.msra.mxu0 0
        %1291 = vmatprep.subr.bf16.mxu0 0
        %1292 = vmatpush1.bf16.msra.mxu0 0
        %1293 = vmatprep.subr.bf16.mxu0 0
        %1294 = vmatpush1.bf16.msra.mxu0 0
        %1295 = vmatprep.subr.bf16.mxu0 0
        %1296 = vmatpush1.bf16.msra.mxu0 0
        %1297 = vmatprep.subr.bf16.mxu0 0
        %1298 = vmatpush1.bf16.msra.mxu0 0
        %1299 = vmatprep.subr.bf16.mxu0 0
        %1300 = vmatpush1.bf16.msra.mxu0 0
        %1301 = vmatprep.subr.bf16.mxu0 0
        %1302 = vmatpush1.bf16.msra.mxu0 0
        %1303 = vmatprep.mubr.bf16.mxu0 0
        %1304 = vmatmul.mubr.bf16.gmra.mrb[0].mxu0 %v1219
        %v1305 = vpop.f32.mrb[0].mxu0
        %v1306 = vadd.f32 0.0, %v1305
        %v1307 = vpop.f32.mrb[0].mxu0
        %v1308 = vpop.f32.mrb[0].mxu0
        %v1309 = vpop.f32.mrb[0].mxu0
        %1310 = vdwg.mxu0
        %v1311 = vadd.f32 %v1201, %v1265
        %v1312 = vadd.f32 %v1202, %v1267
        %v1313 = vadd.f32 %v1203, %v1306
        %v1314 = vld [vmem:[#allocation8] sm:$0xff]
        %1316 = vset.pattern.permute.xlu0 0
        %1317 = vperm.xlu0 %1316, %v1314
        %v1318 = vpop.permute.xlu0 %1317
        %v1320 = vadd.f32 %v1311, %v1318
        %v1321 = vadd.f32 %v1312, %v1318
        %v1322 = vadd.f32 %v1313, %v1318
        %vm1323 = vcmp.ge.f32.partialorder %v1320, 0.0
        %vm1324 = vcmp.ge.f32.partialorder %v1321, 0.0
        %vm1325 = vcmp.ge.f32.partialorder %v1322, 0.0
        %1326 = vset.pattern.permute.xlu0 1
        %1327 = vperm.xlu0 %1326, %v1314
        %v1328 = vpop.permute.xlu0 %1327
        %v1330 = vmul.f32 %v1328, %v1320
        %v1331 = vmul.f32 %v1328, %v1321
        %v1332 = vmul.f32 %v1328, %v1322
        %v1333 = vsel %vm1323, %v1320, %v1330
        %v1334 = vsel %vm1324, %v1321, %v1331
        %v1335 = vsel %vm1325, %v1322, %v1332
        %1336 = vst [vmem:[%s311] sm:$0xff] %v1333
        %1337 = vst [vmem:[%s311 + $0x8] sm:$0xff] %v1334
        %1338 = vst [vmem:[%s311 + $0x10] sm:$0xff] %v1335
        %s1339 = sand.u32 %s149, 1
        %s1340 = scalar_lea.sflag [#allocation4], %s1339
        %s1341 = sand.u32 %s149, 1
        %s1342 = smul.addr %s1341, 24
        %s1343 = scalar_lea.vmem [#allocation10], %s1342
        // Predicated region
        $region53: #{tpu_custom_call.1} parent=35 // pred_check
          %p1344 = pneg %p159
        $region54: #{tpu_custom_call.1} parent=35 // pred_check_branch
          %1346 = sbr.rel (%p1344) target = $region56
        $region55: #{tpu_custom_call.1} parent=35 // pred_region
          %s1347 = smul.u32 3, %s30
          %s1349 = ssub.s32 384, 384
          %1350 = vsyncadd %s1340, %s1349
          %s1351 = smul.addr %s29, 3
          %s1352 = sadd.s32 %s1347, %s1351
          %s1353 = smul.addr %s1352, 128
          %s1354 = scalar_lea.hbm %s4, %s1353
          %s1356 = sshll.u32 %s1343, 4
          %s1357 = int_to_ptr.vmem [resolvable:$true] %s1356
          %1359 = dma.vmem_to_hbm [thread:$0]  %s1357, 384, %s1354, %s1340
        $region56: #{tpu_custom_call.1} parent=35 // pred_fallthru
          _
      $region36: #{tpu_custom_call.1} parent=5 // pred_fallthru
        _
      %p1360 = scmp.le.s32.totalorder 2, %s20
      // Predicated region
      $region57: #{tpu_custom_call.1} parent=5 // pred_check
        %p1361 = pneg %p1360
      $region58: #{tpu_custom_call.1} parent=5 // pred_check_branch
        %1363 = sbr.rel (%p1361) target = $region60
      $region59: #{tpu_custom_call.1} parent=5 // pred_region
        %s1364 = ssub.s32 %s20, 2
        // Predicated region
        $region61: #{tpu_custom_call.1} parent=59 // pred_check
          %p1365 = pneg %p165
        $region62: #{tpu_custom_call.1} parent=59 // pred_check_branch
          %1367 = sbr.rel (%p1365) target = $region64
        $region63: #{tpu_custom_call.1} parent=59 // pred_region
          %s1368 = sand.u32 %s150, 1
          %s1369 = scalar_lea.sflag [#allocation4], %s1368
          %s1370 = sand.u32 %s150, 1
          %s1371 = smul.addr %s1370, 24
          %s1372 = scalar_lea.vmem [#allocation10], %s1371
          %1373 = dma.done %s1369, 384
        $region64: #{tpu_custom_call.1} parent=59 // pred_fallthru
          _
      $region60: #{tpu_custom_call.1} parent=5 // pred_fallthru
        _
    $region6: #{tpu_custom_call.1} parent=1 // loop_footer
      %s24 = sadd.s32 1, %s20
    $region7: #{tpu_custom_call.1} parent=1 // loop_footer_branch
      %19 = sbr.rel target = $region3
    $region8: #{tpu_custom_call.1} parent=1 // loop_exit
      _
    %1374 = vsyncpa [#allocation3], 1
    %s1375 = scalar_lea.sflag [#allocation3], 1
    %1376 = vsyncpa %s1375, 1
    %1377 = vsyncpa [#allocation6], 1
    %s1378 = scalar_lea.sflag [#allocation6], 1
    %1379 = vsyncpa %s1378, 1
    %1380 = vsyncpa [#allocation9], 1
    %1381 = vsyncpa [#allocation4], 1
    %s1382 = scalar_lea.sflag [#allocation4], 1
    %1383 = vsyncpa %s1382, 1

</llo_original>
